<compile_context>
chip_gen: v7x
topology: tpu7x:2x2x1
jax: 0.10.0
libtpu: 0.0.40
codegen_flags: <defaults>
</compile_context>

<pallas_src>
import functools
import math
from typing import NamedTuple, Tuple

import jax
import jax.numpy as jnp
from jax.experimental import pallas as pl
from jax.experimental.pallas import tpu as pltpu

_NEG_SLOPE = 0.2


class Meta(NamedTuple):
    d_so3: int
    d_inv: int
    num_bands: int
    hidden_dims: Tuple[int, ...]
    out_dim: int
    skips: Tuple[bool, ...]


# ----------------------------------------------------------------------------
# Fused kernel: Fourier embedding + whole residual MLP, all VMEM-resident.
# ----------------------------------------------------------------------------
def _fused_kernel(z_so3_ref, z_inv_ref, t_ref, fw2_ref, w_blob_ref, w_last_ref,
                  b_blob_ref, out_ref, *, meta, neg_slope):
    d_so3, d_inv, nb = meta.d_so3, meta.d_inv, meta.num_bands
    hidden = meta.hidden_dims
    skips = meta.skips
    out_dim = meta.out_dim

    # --- Fourier timestep embedding (VPU mul + EUP cos/sin) -----------------
    # fw2 is the pre-scaled (2*pi*W) row duplicated [W | W]; selecting cos on
    # the first nb lanes and sin on the rest reproduces concat([cos, sin], -1)
    # with a single fused select instead of a lane-unaligned concat.
    f = t_ref[...] * fw2_ref[...]                                  # (B, 2nb) f32
    lane = jax.lax.broadcasted_iota(jnp.int32, f.shape, 1)
    t_emb = jnp.where(lane < nb, jnp.cos(f), jnp.sin(f))           # (B, 2nb) f32

    # --- Layer 0: two MXU passes over the "virtual concat" input ------------
    k_rest = d_inv + 2 * nb
    h0 = hidden[0]
    x_so3 = z_so3_ref[...].astype(jnp.bfloat16)                    # (B, 768)
    # First operand is lane-aligned (256); aligned minor-dim concat is cheap.
    x_rest = jnp.concatenate([z_inv_ref[...], t_emb],
                             axis=-1).astype(jnp.bfloat16)         # (B, 288)
    h = jnp.dot(x_so3, w_blob_ref[0:d_so3, :],
                preferred_element_type=jnp.float32)
    h = h + jnp.dot(x_rest, w_blob_ref[d_so3:d_so3 + k_rest, :],
                    preferred_element_type=jnp.float32)
    h = h + b_blob_ref[:, 0:h0]
    feat = jnp.maximum(h, neg_slope * h)                           # LeakyReLU f32
    # (skips[0] is guaranteed False by pack_params for the fused path.)

    # --- Hidden layers; activation never leaves the chip --------------------
    row = d_so3 + k_rest
    col = h0
    for li in range(1, len(hidden)):
        hin, hout = hidden[li - 1], hidden[li]
        y = jnp.dot(feat.astype(jnp.bfloat16), w_blob_ref[row:row + hin, :],
                    preferred_element_type=jnp.float32)
        y = y + b_blob_ref[:, col:col + hout]
        y = jnp.maximum(y, neg_slope * y)
        if skips[li]:
            y = y + feat                                           # residual
        feat = y
        row += hin
        col += hout

    # --- Final projection to latent_dim*4 (lane-dense 1024-wide output) -----
    y = jnp.dot(feat.astype(jnp.bfloat16), w_last_ref[...],
                preferred_element_type=jnp.float32)
    y = y + b_blob_ref[:, col:col + out_dim]
    out_ref[...] = jnp.maximum(y, neg_slope * y)


# ----------------------------------------------------------------------------
# Parameter construction (deterministic synthetic, mimics nn.Linear init).
# ----------------------------------------------------------------------------
def init_params(key, latent_dim, hidden_dims, num_bands, std):
    latent_dim4 = latent_dim * 4
    t_emb_dim = 2 * num_bands
    n_layers = len(hidden_dims) + 1
    keys = jax.random.split(key, 2 * n_layers + 1)
    k_iter = iter(keys)

    fourier_w = std * jax.random.normal(next(k_iter), (num_bands, 1), jnp.float32)

    dims_in, dims_out, skips = [], [], []
    for i, h in enumerate(hidden_dims):
        in_dim = latent_dim4 + t_emb_dim if i == 0 else hidden_dims[i - 1]
        dims_in.append(in_dim)
        dims_out.append(h)
        skips.append(in_dim == h)
    dims_in.append(hidden_dims[-1])
    dims_out.append(latent_dim4)
    skips.append(False)

    layers = []
    for in_dim, out_dim in zip(dims_in, dims_out):
        bound = 1.0 / math.sqrt(in_dim)          # torch nn.Linear default range
        w = jax.random.uniform(next(k_iter), (in_dim, out_dim), jnp.float32,
                               minval=-bound, maxval=bound)
        b = jax.random.uniform(next(k_iter), (out_dim,), jnp.float32,
                               minval=-bound, maxval=bound)
        layers.append((w, b))
    return {"fourier_w": fourier_w, "layers": layers, "skips": skips}


# ----------------------------------------------------------------------------
# One-time packing: all casts / slices / transposes happen here, not per call.
# ----------------------------------------------------------------------------
def pack_params(params):
    fourier_w = params["fourier_w"]                     # (num_bands, 1)
    num_bands = int(fourier_w.shape[0])
    layers = params["layers"]
    skips = tuple(bool(s) for s in params["skips"])

    out_dim = int(layers[-1][0].shape[1])               # latent_dim * 4
    latent_dim = out_dim // 4
    d_so3, d_inv = 3 * latent_dim, latent_dim
    in0 = int(layers[0][0].shape[0])
    assert in0 == d_so3 + d_inv + 2 * num_bands

    if skips[0]:
        # TODO(synk): residual on layer 0 would need the full concatenated
        # input inside the kernel; this module config never hits it (in0 != h0).
        raise NotImplementedError("skip connection on layer 0 not supported")

    hidden_dims = tuple(int(w.shape[1]) for w, _ in layers[:-1])
    h0 = hidden_dims[0]
    assert all(h == h0 for h in hidden_dims), (
        "fused kernel packs hidden weights into one blob; needs equal hidden dims")

    # Contiguous bf16 weight blob: rows = [W0 | W1 | ... | W_{n-2}].
    w_blob = jnp.concatenate([w for w, _ in layers[:-1]],
                             axis=0).astype(jnp.bfloat16)
    w_last = layers[-1][0].astype(jnp.bfloat16)
    # Contiguous f32 bias row: [b0 | b1 | ... | b_last].
    b_blob = jnp.concatenate([b for _, b in layers],
                             axis=0).reshape(1, -1).astype(jnp.float32)
    # Fourier row pre-scaled by 2*pi and duplicated for the cos/sin halves.
    fw_row = (2.0 * jnp.pi) * fourier_w.T.astype(jnp.float32)       # (1, nb)
    fw2 = jnp.concatenate([fw_row, fw_row], axis=-1)                # (1, 2nb)

    packed = {"w_blob": w_blob, "w_last": w_last, "b_blob": b_blob, "fw2": fw2}
    meta = Meta(d_so3=d_so3, d_inv=d_inv, num_bands=num_bands,
                hidden_dims=hidden_dims, out_dim=out_dim, skips=skips)
    return packed, meta


# ----------------------------------------------------------------------------
# Jitted forward: one fused pallas_call; only live-input reshapes per call.
# ----------------------------------------------------------------------------
def make_forward(meta, neg_slope=_NEG_SLOPE):
    kernel = functools.partial(_fused_kernel, meta=meta, neg_slope=neg_slope)

    layer_dims = ([(meta.d_so3 + meta.d_inv + 2 * meta.num_bands, meta.hidden_dims[0])]
                  + [(meta.hidden_dims[i - 1], meta.hidden_dims[i])
                     for i in range(1, len(meta.hidden_dims))]
                  + [(meta.hidden_dims[-1], meta.out_dim)])
    flops_per_row = 2 * sum(i * o for i, o in layer_dims)

    @jax.jit
    def forward(packed, z_so3, z_inv, t):
        batch = z_so3.shape[0]
        z_so3_flat = z_so3.reshape(batch, -1).astype(jnp.float32)   # free reshape
        z_inv_f = z_inv.astype(jnp.float32)
        t_f = t.astype(jnp.float32)

        inputs = (z_so3_flat, z_inv_f, t_f, packed["fw2"], packed["w_blob"],
                  packed["w_last"], packed["b_blob"])

        bytes_accessed = sum(int(a.size) * a.dtype.itemsize for a in inputs)
        bytes_accessed += batch * meta.out_dim * 4
        cost = pl.CostEstimate(flops=batch * flops_per_row,
                               transcendentals=batch * 2 * meta.num_bands,
                               bytes_accessed=bytes_accessed)

        feat = pl.pallas_call(
            kernel,
            out_shape=jax.ShapeDtypeStruct((batch, meta.out_dim), jnp.float32),
            in_specs=[pl.BlockSpec(memory_space=pltpu.MemorySpace.VMEM)] * len(inputs),
            out_specs=pl.BlockSpec(memory_space=pltpu.MemorySpace.VMEM),
            cost_estimate=cost,
        )(*inputs)

        pred_z_so3 = feat[:, :3 * 256].reshape(batch, -1, 3)
        pred_z_inv = feat[:, 3 * 256:]
        return pred_z_so3, pred_z_inv

    return forward


# ----------------------------------------------------------------------------
# Pure-JAX reference mirroring the kernel numerics (bf16 MXU operands, f32
# accumulate, f32 element-wise math) so the check isolates kernel correctness.
# ----------------------------------------------------------------------------
def reference_forward(params, z_so3, z_inv, t, neg_slope=_NEG_SLOPE):
    batch = z_so3.shape[0]
    f = 2.0 * jnp.pi * jnp.dot(t.astype(jnp.float32),
                               params["fourier_w"].T.astype(jnp.float32))
    t_emb = jnp.concatenate([jnp.cos(f), jnp.sin(f)], axis=1)
    feat = jnp.concatenate([z_so3.reshape(batch, -1), z_inv, t_emb],
                           axis=1).astype(jnp.float32)
    for (w, b), skip in zip(params["layers"], params["skips"]):
        y = jnp.dot(feat.astype(jnp.bfloat16), w.astype(jnp.bfloat16),
                    preferred_element_type=jnp.float32) + b
        y = jnp.where(y >= 0, y, neg_slope * y)
        feat = y + feat if skip else y
    return feat[:, :3 * 256].reshape(batch, -1, 3), feat[:, 3 * 256:]


if __name__ == "__main__":
    # latent_dim must be 256 for the module's hard-coded 3*256 output slicing.
    latent_dim = 256
    hidden_dims = [256, 256]   # second layer gets a residual skip (256 -> 256)
    max_freq = 4.0             # unused by this FourierFeatures variant
    num_bands = 16
    std = 0.2
    batch = 16                 # >=16 keeps bf16 LHS vregs fully sublane-packed

    key = jax.random.PRNGKey(0)
    k_params, k_so3, k_inv, k_t = jax.random.split(key, 4)

    params = init_params(k_params, latent_dim, hidden_dims, num_bands, std)
    packed, meta = pack_params(params)       # one-time; hoisted out of forward
    forward = make_forward(meta)

    z_so3 = jax.random.normal(k_so3, (batch, latent_dim, 3), jnp.float32)
    z_inv = jax.random.normal(k_inv, (batch, latent_dim), jnp.float32)
    t = jax.random.uniform(k_t, (batch, 1), jnp.float32)

    pred_z_so3, pred_z_inv = forward(packed, z_so3, z_inv, t)
    jax.block_until_ready((pred_z_so3, pred_z_inv))

    assert pred_z_so3.shape == (batch, 256, 3)
    assert pred_z_inv.shape == (batch, 4 * latent_dim - 3 * 256)

    ref_so3, ref_inv = reference_forward(params, z_so3, z_inv, t)
    # bf16 MXU operands with f32 accumulate on both sides -> modest tolerance.
    assert jnp.allclose(pred_z_so3, ref_so3, atol=2e-2, rtol=2e-2), (
        float(jnp.max(jnp.abs(pred_z_so3 - ref_so3))))
    assert jnp.allclose(pred_z_inv, ref_inv, atol=2e-2, rtol=2e-2), (
        float(jnp.max(jnp.abs(pred_z_inv - ref_inv))))

    print("KERNEL_OK")
</pallas_src>

<mosaic_0001>
module attributes {stable_mosaic.version = 11 : i64} {
  func.func @_fused_kernel(%arg0: memref<16x768xf32, #tpu.memory_space<vmem>>, %arg1: memref<16x256xf32, #tpu.memory_space<vmem>>, %arg2: memref<16x1xf32, #tpu.memory_space<vmem>>, %arg3: memref<1x32xf32, #tpu.memory_space<vmem>>, %arg4: memref<1312x256xbf16, #tpu.memory_space<vmem>>, %arg5: memref<256x1024xbf16, #tpu.memory_space<vmem>>, %arg6: memref<1x1536xf32, #tpu.memory_space<vmem>>, %arg7: memref<16x1024xf32, #tpu.memory_space<vmem>>) attributes {dimension_semantics = [], scalar_prefetch = 0 : i64, scratch_operands = 0 : i64, tpu.core_type = #tpu.core_type<tc>} {
    %c0 = arith.constant 0 : index
    %c0_0 = arith.constant 0 : index
    %0 = vector.load %arg2[%c0, %c0_0] : memref<16x1xf32, #tpu.memory_space<vmem>>, vector<16x1xf32>
    %c0_1 = arith.constant 0 : index
    %c0_2 = arith.constant 0 : index
    %1 = vector.load %arg3[%c0_1, %c0_2] : memref<1x32xf32, #tpu.memory_space<vmem>>, vector<1x32xf32>
    %2 = vector.broadcast %0 : vector<16x1xf32> to vector<16x32xf32>
    %3 = vector.broadcast %1 : vector<1x32xf32> to vector<16x32xf32>
    %4 = arith.mulf %2, %3 : vector<16x32xf32>
    %5 = tpu.iota {dimensions = array<i32: 1>} : vector<16x32xi32>
    %c16_i32 = arith.constant 16 : i32
    %6 = vector.broadcast %c16_i32 : i32 to vector<16x32xi32>
    %7 = arith.cmpi slt, %5, %6 : vector<16x32xi32>
    %8 = math.cos %4 : vector<16x32xf32>
    %9 = math.sin %4 : vector<16x32xf32>
    %10 = arith.select %7, %8, %9 : vector<16x32xi1>, vector<16x32xf32>
    %c0_3 = arith.constant 0 : index
    %c0_4 = arith.constant 0 : index
    %11 = vector.load %arg0[%c0_3, %c0_4] : memref<16x768xf32, #tpu.memory_space<vmem>>, vector<16x768xf32>
    %12 = arith.truncf %11 : vector<16x768xf32> to vector<16x768xbf16>
    %c0_5 = arith.constant 0 : index
    %c0_6 = arith.constant 0 : index
    %13 = vector.load %arg1[%c0_5, %c0_6] : memref<16x256xf32, #tpu.memory_space<vmem>>, vector<16x256xf32>
    %14 = tpu.concatenate %13, %10 in 1 : vector<16x256xf32>, vector<16x32xf32> -> vector<16x288xf32>
    %15 = arith.truncf %14 : vector<16x288xf32> to vector<16x288xbf16>
    %c0_7 = arith.constant 0 : index
    %c0_8 = arith.constant 0 : index
    %16 = vector.load %arg4[%c0_7, %c0_8] : memref<1312x256xbf16, #tpu.memory_space<vmem>>, vector<768x256xbf16>
    %cst = arith.constant dense<0.000000e+00> : vector<16x256xf32>
    %17 = tpu.matmul %12, %16, %cst {dimension_numbers = #tpu.dot_dimension_numbers<[1], [0], [0], [1], [0, 0, 1, 1], [], []>} : vector<16x768xbf16>, vector<768x256xbf16>, vector<16x256xf32> -> vector<16x256xf32>
    %c768 = arith.constant 768 : index
    %c0_9 = arith.constant 0 : index
    %18 = vector.load %arg4[%c768, %c0_9] : memref<1312x256xbf16, #tpu.memory_space<vmem>>, vector<288x256xbf16>
    %cst_10 = arith.constant dense<0.000000e+00> : vector<16x256xf32>
    %19 = tpu.matmul %15, %18, %cst_10 {dimension_numbers = #tpu.dot_dimension_numbers<[1], [0], [0], [1], [0, 0, 1, 1], [], []>} : vector<16x288xbf16>, vector<288x256xbf16>, vector<16x256xf32> -> vector<16x256xf32>
    %20 = arith.addf %17, %19 : vector<16x256xf32>
    %c0_11 = arith.constant 0 : index
    %c0_12 = arith.constant 0 : index
    %21 = vector.load %arg6[%c0_11, %c0_12] : memref<1x1536xf32, #tpu.memory_space<vmem>>, vector<1x256xf32>
    %22 = vector.broadcast %21 : vector<1x256xf32> to vector<16x256xf32>
    %23 = arith.addf %20, %22 : vector<16x256xf32>
    %cst_13 = arith.constant 2.000000e-01 : f32
    %24 = vector.broadcast %cst_13 : f32 to vector<16x256xf32>
    %25 = arith.mulf %24, %23 : vector<16x256xf32>
    %26 = arith.maximumf %23, %25 : vector<16x256xf32>
    %27 = arith.truncf %26 : vector<16x256xf32> to vector<16x256xbf16>
    %c1056 = arith.constant 1056 : index
    %c0_14 = arith.constant 0 : index
    %28 = vector.load %arg4[%c1056, %c0_14] : memref<1312x256xbf16, #tpu.memory_space<vmem>>, vector<256x256xbf16>
    %cst_15 = arith.constant dense<0.000000e+00> : vector<16x256xf32>
    %29 = tpu.matmul %27, %28, %cst_15 {dimension_numbers = #tpu.dot_dimension_numbers<[1], [0], [0], [1], [0, 0, 1, 1], [], []>} : vector<16x256xbf16>, vector<256x256xbf16>, vector<16x256xf32> -> vector<16x256xf32>
    %c0_16 = arith.constant 0 : index
    %c256 = arith.constant 256 : index
    %30 = vector.load %arg6[%c0_16, %c256] : memref<1x1536xf32, #tpu.memory_space<vmem>>, vector<1x256xf32>
    %31 = vector.broadcast %30 : vector<1x256xf32> to vector<16x256xf32>
    %32 = arith.addf %29, %31 : vector<16x256xf32>
    %cst_17 = arith.constant 2.000000e-01 : f32
    %33 = vector.broadcast %cst_17 : f32 to vector<16x256xf32>
    %34 = arith.mulf %33, %32 : vector<16x256xf32>
    %35 = arith.maximumf %32, %34 : vector<16x256xf32>
    %36 = arith.addf %35, %26 : vector<16x256xf32>
    %37 = arith.truncf %36 : vector<16x256xf32> to vector<16x256xbf16>
    %c0_18 = arith.constant 0 : index
    %c0_19 = arith.constant 0 : index
    %38 = vector.load %arg5[%c0_18, %c0_19] : memref<256x1024xbf16, #tpu.memory_space<vmem>>, vector<256x1024xbf16>
    %cst_20 = arith.constant dense<0.000000e+00> : vector<16x1024xf32>
    %39 = tpu.matmul %37, %38, %cst_20 {dimension_numbers = #tpu.dot_dimension_numbers<[1], [0], [0], [1], [0, 0, 1, 1], [], []>} : vector<16x256xbf16>, vector<256x1024xbf16>, vector<16x1024xf32> -> vector<16x1024xf32>
    %c0_21 = arith.constant 0 : index
    %c512 = arith.constant 512 : index
    %40 = vector.load %arg6[%c0_21, %c512] : memref<1x1536xf32, #tpu.memory_space<vmem>>, vector<1x1024xf32>
    %41 = vector.broadcast %40 : vector<1x1024xf32> to vector<16x1024xf32>
    %42 = arith.addf %39, %41 : vector<16x1024xf32>
    %cst_22 = arith.constant 2.000000e-01 : f32
    %43 = vector.broadcast %cst_22 : f32 to vector<16x1024xf32>
    %44 = arith.mulf %43, %42 : vector<16x1024xf32>
    %45 = arith.maximumf %42, %44 : vector<16x1024xf32>
    %c0_23 = arith.constant 0 : index
    %c0_24 = arith.constant 0 : index
    %46 = vector.load %arg7[%c0_23, %c0_24] : memref<16x1024xf32, #tpu.memory_space<vmem>>, vector<16x1024xf32>
    tpu.vector_store %arg7[%c0_23, %c0_24], %45 {strides = array<i32>} : memref<16x1024xf32, #tpu.memory_space<vmem>>, vector<16x1024xf32>,
    return
  }
}

</mosaic_0001>

<llo_original>
// kernel: forward.1
$region0: #{forward.1}
  #allocation0 [shape = 'u32[]', space=smem, size = 0x4, offset = 0x4, fixed_abs, tag = 'smem constant byte address 0x4 - core index']
  #allocation1 [shape = 'u32[144,128]{1,0:T(1,128)}', space=vmem, size = 0x12000, scoped, tag = 'internal scratch']
  %s0 = inlined_call_operand.vmem [shape: f32[16,768], index: 0, kind: input, shape index: {}]
  %s1 = inlined_call_operand.vmem [shape: f32[16,256], index: 1, kind: input, shape index: {}]
  %s2 = inlined_call_operand.vmem [shape: f32[16,1], index: 2, kind: input, shape index: {}]
  %s3 = inlined_call_operand.vmem [shape: f32[1,32], index: 3, kind: input, shape index: {}]
  %s4 = inlined_call_operand.vmem [shape: bf16[1312,256], index: 4, kind: input, shape index: {}]
  %s5 = inlined_call_operand.vmem [shape: bf16[256,1024], index: 5, kind: input, shape index: {}]
  %s6 = inlined_call_operand.vmem [shape: f32[1,1536], index: 6, kind: input, shape index: {}]
  %s7 = inlined_call_operand.vmem [shape: f32[16,1024], index: 7, kind: output, shape index: {}]
  %s8 = sld [smem:[#allocation0]]
  $region38: #{forward.1} parent=0
    _
  %s10 = ssub.s32 1, %s8
  %s11 = scalar_select 0, %s10, %s8
  // Predicated region
  $region2: #{forward.1} parent=0 // pred_check
    _
  $region3: #{forward.1} parent=0 // pred_check_branch
    %13 = sbr.rel (0) target = $region5
  $region4: #{forward.1} parent=0 // pred_region
    _
  $region5: #{forward.1} parent=0 // pred_fallthru
    _
  // Predicated region
  $region6: #{forward.1} parent=0 // pred_check
    _
  $region7: #{forward.1} parent=0 // pred_check_branch
    %15 = sbr.rel (0) target = $region9
  $region8: #{forward.1} parent=0 // pred_region
    _
  $region9: #{forward.1} parent=0 // pred_fallthru
    _
  // Predicated region
  $region10: #{forward.1} parent=0 // pred_check
    _
  $region11: #{forward.1} parent=0 // pred_check_branch
    %17 = sbr.rel (0) target = $region13
  $region12: #{forward.1} parent=0 // pred_region
    _
  $region13: #{forward.1} parent=0 // pred_fallthru
    _
  // Predicated region
  $region14: #{forward.1} parent=0 // pred_check
    _
  $region15: #{forward.1} parent=0 // pred_check_branch
    %19 = sbr.rel (0) target = $region17
  $region16: #{forward.1} parent=0 // pred_region
    _
  $region17: #{forward.1} parent=0 // pred_fallthru
    _
  // Predicated region
  $region18: #{forward.1} parent=0 // pred_check
    _
  $region19: #{forward.1} parent=0 // pred_check_branch
    %21 = sbr.rel (0) target = $region21
  $region20: #{forward.1} parent=0 // pred_region
    _
  $region21: #{forward.1} parent=0 // pred_fallthru
    _
  // Predicated region
  $region22: #{forward.1} parent=0 // pred_check
    _
  $region23: #{forward.1} parent=0 // pred_check_branch
    %23 = sbr.rel (0) target = $region25
  $region24: #{forward.1} parent=0 // pred_region
    _
  $region25: #{forward.1} parent=0 // pred_fallthru
    _
  // Predicated region
  $region26: #{forward.1} parent=0 // pred_check
    _
  $region27: #{forward.1} parent=0 // pred_check_branch
    %25 = sbr.rel (0) target = $region29
  $region28: #{forward.1} parent=0 // pred_region
    _
  $region29: #{forward.1} parent=0 // pred_fallthru
    _
  %v27 = vld [vmem:[%s2] sm:$0xff]
  %v28 = vld [vmem:[%s2 + $0x8] sm:$0xff]
  %v29 = vld [vmem:[%s3] sm:$0x1]
  %31 = vset.pattern.permute.xlu0 0
  %32 = vperm.xlu0 %31, %v27
  %v33 = vpop.permute.xlu0 %32
  %36 = vset.pattern.permute.xlu0 0
  %37 = vperm.xlu0 %36, %v28
  %v38 = vpop.permute.xlu0 %37
  %v41 = vlaneseq
  %v42 = vshrl.u32 %v41, 7
  %v43 = vsub.s32 0, %v42
  %v44 = vrot.slane %v29, %v43
  %v46 = vmul.f32 %v33, %v44
  %v47 = vmul.f32 %v38, %v44
  %v48 = vlaneseq
  %v49 = vand.u32 %v48, 127
  %vm50 = vcmp.lt.s32.totalorder %v49, 16
  %v51 = vand.u32 2147483647, %v46
  %vm52 = vcmp.le.f32.partialorder %v51, 0.7853982
  %vm53 = vcmp.lt.s32.totalorder %v46, 0
  %v54 = vand.u32 %v46, 2139095040
  %v55 = vshrl.u32 %v54, 23
  %v56 = vsub.s32 %v55, 127
  %v57 = vand.u32 2147483647, %v46
  %v58 = vand.u32 %v57, 8388607
  %v59 = vor.u32 %v58, 8388608
  %v60 = vsub.s32 0, %v59
  %v61 = vadd.s32 %v56, 1
  %vm62 = vcmp.gt.s32.totalorder %v61, 0
  %v63 = vsel %vm62, %v61, 0
  %v64 = vshrl.u32 %v63, 5
  %v65 = vand.u32 %v63, 31
  %v66 = vsub.s32 32, %v65
  %v67 = vshrl.u32 683565275, %v66
  %v68 = vshll.u32 683565275, %v65
  %v69 = vshrl.u32 2475754826, %v66
  %v70 = vor.u32 %v68, %v69
  %v71 = vshll.u32 2475754826, %v65
  %v72 = vshrl.u32 2131351028, %v66
  %v73 = vor.u32 %v71, %v72
  %v74 = vshll.u32 2131351028, %v65
  %v75 = vshrl.u32 2102212464, %v66
  %v76 = vor.u32 %v74, %v75
  %v77 = vshll.u32 2102212464, %v65
  %v78 = vshrl.u32 920167782, %v66
  %v79 = vor.u32 %v77, %v78
  %v80 = vshll.u32 920167782, %v65
  %v81 = vshrl.u32 1326507024, %v66
  %v82 = vor.u32 %v80, %v81
  %vm83 = vcmp.lt.s32.totalorder %v64, 1
  %vm84 = vcmp.lt.s32.totalorder %v64, 2
  %vm85 = vcmp.lt.s32.totalorder %v64, 3
  %vm86 = vcmp.lt.s32.totalorder %v64, 4
  %v87 = vsel %vm83, %v67, %v70
  %v88 = vsel %vm86, %v76, 2102212464
  %v89 = vsel %vm85, %v73, %v88
  %v90 = vsel %vm84, %v87, %v89
  %v91 = vsel %vm83, %v70, %v73
  %v92 = vsel %vm86, %v79, 920167782
  %v93 = vsel %vm85, %v76, %v92
  %v94 = vsel %vm84, %v91, %v93
  %v95 = vsel %vm83, %v73, %v76
  %v96 = vsel %vm86, %v82, 1326507024
  %v97 = vsel %vm85, %v79, %v96
  %v98 = vsel %vm84, %v95, %v97
  %v99 = vshll.u32 %v59, 8
  %v100 = vmul.u32.u64.compose %v99, %v98
  %v101 = vextract.low.u32 %v100
  %v102 = vextract.high.u32 %v100
  %v103 = vmul.u32.u64.compose %v99, %v94
  %v104 = vextract.low.u32 %v103
  %v105 = vextract.high.u32 %v103
  %v106 = vmul.u32 %v99, %v90
  %v107 = vadd.s32 %v102, %v104
  %vm108 = vc.u32 %v102, %v104
  %v109 = vadd.s32 %v105, 1
  %v110 = vsel %vm108, %v109, %v105
  %v111 = vadd.s32 %v106, %v110
  %v112 = vadd.s32 %v111, 536870912
  %v113 = vshrl.u32 %v112, 30
  %v114 = vshll.u32 %v113, 30
  %v115 = vsub.s32 %v111, %v114
  %vm116 = vcmp.lt.s32.totalorder %v115, 0
  %v117 = vsub.s32 0, %v115
  %v118 = vsel %vm116, %v117, %v115
  %v119 = vclz %v118
  %v120 = vsub.s32 %v119, 2
  %vm121 = vcmp.gt.s32.totalorder 0, %v120
  %v122 = vsel %vm121, 0, %v120
  %v123 = vsub.s32 32, %v122
  %v124 = vshll.u32 %v115, %v122
  %v125 = vshrl.u32 %v107, %v123
  %v126 = vor.u32 %v124, %v125
  %v127 = vsub.s32 4294967266, %v122
  %v128 = vadd.s32 %v127, 127
  %v129 = vshll.u32 %v128, 23
  %v130 = vor.u32 4788187, %v129
  %v131 = vand.u32 2147483647, %v130
  %v133 = vcvt.s32.f32 %v126
  %v134 = vmul.f32 %v133, %v131
  %v135 = vxor.u32 %v134, 2147483648
  %v136 = vsel %vm53, %v135, %v134
  %v137 = vsub.s32 4, %v113
  %v138 = vsel %vm53, %v137, %v113
  %v139 = vsel %vm52, %v46, %v136
  %v140 = vsel %vm52, 0, %v138
  %v141 = vcosq.f32.pop %v139
  %v142 = vsinq.f32.pop %v139
  %vm143 = vweird.f32 %v46
  %v144 = vand.u32 %v140, 3
  %vm145 = vcmp.lt.s32.totalorder %v144, 2
  %vm146 = vcmp.eq.s32.totalorder %v144, 0
  %v147 = vxor.u32 %v142, 2147483648
  %v148 = vsel %vm146, %v141, %v147
  %vm149 = vcmp.eq.s32.totalorder %v144, 2
  %v150 = vxor.u32 %v141, 2147483648
  %v151 = vsel %vm149, %v150, %v142
  %v152 = vsel %vm145, %v148, %v151
  %v153 = vsel %vm143, nan, %v152
  %v154 = vand.u32 2147483647, %v47
  %vm155 = vcmp.le.f32.partialorder %v154, 0.7853982
  %vm156 = vcmp.lt.s32.totalorder %v47, 0
  %v157 = vand.u32 %v47, 2139095040
  %v158 = vshrl.u32 %v157, 23
  %v159 = vsub.s32 %v158, 127
  %v160 = vand.u32 2147483647, %v47
  %v161 = vand.u32 %v160, 8388607
  %v162 = vor.u32 %v161, 8388608
  %v163 = vsub.s32 0, %v162
  %v164 = vadd.s32 %v159, 1
  %vm165 = vcmp.gt.s32.totalorder %v164, 0
  %v166 = vsel %vm165, %v164, 0
  %v167 = vshrl.u32 %v166, 5
  %v168 = vand.u32 %v166, 31
  %v169 = vsub.s32 32, %v168
  %v170 = vshrl.u32 683565275, %v169
  %v171 = vshll.u32 683565275, %v168
  %v172 = vshrl.u32 2475754826, %v169
  %v173 = vor.u32 %v171, %v172
  %v174 = vshll.u32 2475754826, %v168
  %v175 = vshrl.u32 2131351028, %v169
  %v176 = vor.u32 %v174, %v175
  %v177 = vshll.u32 2131351028, %v168
  %v178 = vshrl.u32 2102212464, %v169
  %v179 = vor.u32 %v177, %v178
  %v180 = vshll.u32 2102212464, %v168
  %v181 = vshrl.u32 920167782, %v169
  %v182 = vor.u32 %v180, %v181
  %v183 = vshll.u32 920167782, %v168
  %v184 = vshrl.u32 1326507024, %v169
  %v185 = vor.u32 %v183, %v184
  %vm186 = vcmp.lt.s32.totalorder %v167, 1
  %vm187 = vcmp.lt.s32.totalorder %v167, 2
  %vm188 = vcmp.lt.s32.totalorder %v167, 3
  %vm189 = vcmp.lt.s32.totalorder %v167, 4
  %v190 = vsel %vm186, %v170, %v173
  %v191 = vsel %vm189, %v179, 2102212464
  %v192 = vsel %vm188, %v176, %v191
  %v193 = vsel %vm187, %v190, %v192
  %v194 = vsel %vm186, %v173, %v176
  %v195 = vsel %vm189, %v182, 920167782
  %v196 = vsel %vm188, %v179, %v195
  %v197 = vsel %vm187, %v194, %v196
  %v198 = vsel %vm186, %v176, %v179
  %v199 = vsel %vm189, %v185, 1326507024
  %v200 = vsel %vm188, %v182, %v199
  %v201 = vsel %vm187, %v198, %v200
  %v202 = vshll.u32 %v162, 8
  %v203 = vmul.u32.u64.compose %v202, %v201
  %v204 = vextract.low.u32 %v203
  %v205 = vextract.high.u32 %v203
  %v206 = vmul.u32.u64.compose %v202, %v197
  %v207 = vextract.low.u32 %v206
  %v208 = vextract.high.u32 %v206
  %v209 = vmul.u32 %v202, %v193
  %v210 = vadd.s32 %v205, %v207
  %vm211 = vc.u32 %v205, %v207
  %v212 = vadd.s32 %v208, 1
  %v213 = vsel %vm211, %v212, %v208
  %v214 = vadd.s32 %v209, %v213
  %v215 = vadd.s32 %v214, 536870912
  %v216 = vshrl.u32 %v215, 30
  %v217 = vshll.u32 %v216, 30
  %v218 = vsub.s32 %v214, %v217
  %vm219 = vcmp.lt.s32.totalorder %v218, 0
  %v220 = vsub.s32 0, %v218
  %v221 = vsel %vm219, %v220, %v218
  %v222 = vclz %v221
  %v223 = vsub.s32 %v222, 2
  %vm224 = vcmp.gt.s32.totalorder 0, %v223
  %v225 = vsel %vm224, 0, %v223
  %v226 = vsub.s32 32, %v225
  %v227 = vshll.u32 %v218, %v225
  %v228 = vshrl.u32 %v210, %v226
  %v229 = vor.u32 %v227, %v228
  %v230 = vsub.s32 4294967266, %v225
  %v231 = vadd.s32 %v230, 127
  %v232 = vshll.u32 %v231, 23
  %v233 = vor.u32 4788187, %v232
  %v234 = vand.u32 2147483647, %v233
  %v236 = vcvt.s32.f32 %v229
  %v237 = vmul.f32 %v236, %v234
  %v238 = vxor.u32 %v237, 2147483648
  %v239 = vsel %vm156, %v238, %v237
  %v240 = vsub.s32 4, %v216
  %v241 = vsel %vm156, %v240, %v216
  %v242 = vsel %vm155, %v47, %v239
  %v243 = vsel %vm155, 0, %v241
  %v244 = vcosq.f32.pop %v242
  %v245 = vsinq.f32.pop %v242
  %vm246 = vweird.f32 %v47
  %v247 = vand.u32 %v243, 3
  %vm248 = vcmp.lt.s32.totalorder %v247, 2
  %vm249 = vcmp.eq.s32.totalorder %v247, 0
  %v250 = vxor.u32 %v245, 2147483648
  %v251 = vsel %vm249, %v244, %v250
  %vm252 = vcmp.eq.s32.totalorder %v247, 2
  %v253 = vxor.u32 %v244, 2147483648
  %v254 = vsel %vm252, %v253, %v245
  %v255 = vsel %vm248, %v251, %v254
  %v256 = vsel %vm246, nan, %v255
  %v257 = vand.u32 2147483647, %v46
  %vm258 = vcmp.le.f32.partialorder %v257, 0.7853982
  %vm259 = vcmp.lt.s32.totalorder %v46, 0
  %v260 = vand.u32 %v46, 2139095040
  %v261 = vshrl.u32 %v260, 23
  %v262 = vsub.s32 %v261, 127
  %v263 = vand.u32 2147483647, %v46
  %v264 = vand.u32 %v263, 8388607
  %v265 = vor.u32 %v264, 8388608
  %v266 = vsub.s32 0, %v265
  %v267 = vadd.s32 %v262, 1
  %vm268 = vcmp.gt.s32.totalorder %v267, 0
  %v269 = vsel %vm268, %v267, 0
  %v270 = vshrl.u32 %v269, 5
  %v271 = vand.u32 %v269, 31
  %v272 = vsub.s32 32, %v271
  %v273 = vshrl.u32 683565275, %v272
  %v274 = vshll.u32 683565275, %v271
  %v275 = vshrl.u32 2475754826, %v272
  %v276 = vor.u32 %v274, %v275
  %v277 = vshll.u32 2475754826, %v271
  %v278 = vshrl.u32 2131351028, %v272
  %v279 = vor.u32 %v277, %v278
  %v280 = vshll.u32 2131351028, %v271
  %v281 = vshrl.u32 2102212464, %v272
  %v282 = vor.u32 %v280, %v281
  %v283 = vshll.u32 2102212464, %v271
  %v284 = vshrl.u32 920167782, %v272
  %v285 = vor.u32 %v283, %v284
  %v286 = vshll.u32 920167782, %v271
  %v287 = vshrl.u32 1326507024, %v272
  %v288 = vor.u32 %v286, %v287
  %vm289 = vcmp.lt.s32.totalorder %v270, 1
  %vm290 = vcmp.lt.s32.totalorder %v270, 2
  %vm291 = vcmp.lt.s32.totalorder %v270, 3
  %vm292 = vcmp.lt.s32.totalorder %v270, 4
  %v293 = vsel %vm289, %v273, %v276
  %v294 = vsel %vm292, %v282, 2102212464
  %v295 = vsel %vm291, %v279, %v294
  %v296 = vsel %vm290, %v293, %v295
  %v297 = vsel %vm289, %v276, %v279
  %v298 = vsel %vm292, %v285, 920167782
  %v299 = vsel %vm291, %v282, %v298
  %v300 = vsel %vm290, %v297, %v299
  %v301 = vsel %vm289, %v279, %v282
  %v302 = vsel %vm292, %v288, 1326507024
  %v303 = vsel %vm291, %v285, %v302
  %v304 = vsel %vm290, %v301, %v303
  %v305 = vshll.u32 %v265, 8
  %v306 = vmul.u32.u64.compose %v305, %v304
  %v307 = vextract.low.u32 %v306
  %v308 = vextract.high.u32 %v306
  %v309 = vmul.u32.u64.compose %v305, %v300
  %v310 = vextract.low.u32 %v309
  %v311 = vextract.high.u32 %v309
  %v312 = vmul.u32 %v305, %v296
  %v313 = vadd.s32 %v308, %v310
  %vm314 = vc.u32 %v308, %v310
  %v315 = vadd.s32 %v311, 1
  %v316 = vsel %vm314, %v315, %v311
  %v317 = vadd.s32 %v312, %v316
  %v318 = vadd.s32 %v317, 536870912
  %v319 = vshrl.u32 %v318, 30
  %v320 = vshll.u32 %v319, 30
  %v321 = vsub.s32 %v317, %v320
  %vm322 = vcmp.lt.s32.totalorder %v321, 0
  %v323 = vsub.s32 0, %v321
  %v324 = vsel %vm322, %v323, %v321
  %v325 = vclz %v324
  %v326 = vsub.s32 %v325, 2
  %vm327 = vcmp.gt.s32.totalorder 0, %v326
  %v328 = vsel %vm327, 0, %v326
  %v329 = vsub.s32 32, %v328
  %v330 = vshll.u32 %v321, %v328
  %v331 = vshrl.u32 %v313, %v329
  %v332 = vor.u32 %v330, %v331
  %v333 = vsub.s32 4294967266, %v328
  %v334 = vadd.s32 %v333, 127
  %v335 = vshll.u32 %v334, 23
  %v336 = vor.u32 4788187, %v335
  %v337 = vand.u32 2147483647, %v336
  %v339 = vcvt.s32.f32 %v332
  %v340 = vmul.f32 %v339, %v337
  %v341 = vxor.u32 %v340, 2147483648
  %v342 = vsel %vm259, %v341, %v340
  %v343 = vsub.s32 4, %v319
  %v344 = vsel %vm259, %v343, %v319
  %v345 = vsel %vm258, %v46, %v342
  %v346 = vsel %vm258, 0, %v344
  %v347 = vcosq.f32.pop %v345
  %v348 = vsinq.f32.pop %v345
  %vm349 = vweird.f32 %v46
  %v350 = vadd.s32 %v346, 3
  %v351 = vand.u32 %v350, 3
  %vm352 = vcmp.lt.s32.totalorder %v351, 2
  %vm353 = vcmp.eq.s32.totalorder %v351, 0
  %v354 = vxor.u32 %v348, 2147483648
  %v355 = vsel %vm353, %v347, %v354
  %vm356 = vcmp.eq.s32.totalorder %v351, 2
  %v357 = vxor.u32 %v347, 2147483648
  %v358 = vsel %vm356, %v357, %v348
  %v359 = vsel %vm352, %v355, %v358
  %v360 = vsel %vm349, nan, %v359
  %v361 = vand.u32 2147483647, %v47
  %vm362 = vcmp.le.f32.partialorder %v361, 0.7853982
  %vm363 = vcmp.lt.s32.totalorder %v47, 0
  %v364 = vand.u32 %v47, 2139095040
  %v365 = vshrl.u32 %v364, 23
  %v366 = vsub.s32 %v365, 127
  %v367 = vand.u32 2147483647, %v47
  %v368 = vand.u32 %v367, 8388607
  %v369 = vor.u32 %v368, 8388608
  %v370 = vsub.s32 0, %v369
  %v371 = vadd.s32 %v366, 1
  %vm372 = vcmp.gt.s32.totalorder %v371, 0
  %v373 = vsel %vm372, %v371, 0
  %v374 = vshrl.u32 %v373, 5
  %v375 = vand.u32 %v373, 31
  %v376 = vsub.s32 32, %v375
  %v377 = vshrl.u32 683565275, %v376
  %v378 = vshll.u32 683565275, %v375
  %v379 = vshrl.u32 2475754826, %v376
  %v380 = vor.u32 %v378, %v379
  %v381 = vshll.u32 2475754826, %v375
  %v382 = vshrl.u32 2131351028, %v376
  %v383 = vor.u32 %v381, %v382
  %v384 = vshll.u32 2131351028, %v375
  %v385 = vshrl.u32 2102212464, %v376
  %v386 = vor.u32 %v384, %v385
  %v387 = vshll.u32 2102212464, %v375
  %v388 = vshrl.u32 920167782, %v376
  %v389 = vor.u32 %v387, %v388
  %v390 = vshll.u32 920167782, %v375
  %v391 = vshrl.u32 1326507024, %v376
  %v392 = vor.u32 %v390, %v391
  %vm393 = vcmp.lt.s32.totalorder %v374, 1
  %vm394 = vcmp.lt.s32.totalorder %v374, 2
  %vm395 = vcmp.lt.s32.totalorder %v374, 3
  %vm396 = vcmp.lt.s32.totalorder %v374, 4
  %v397 = vsel %vm393, %v377, %v380
  %v398 = vsel %vm396, %v386, 2102212464
  %v399 = vsel %vm395, %v383, %v398
  %v400 = vsel %vm394, %v397, %v399
  %v401 = vsel %vm393, %v380, %v383
  %v402 = vsel %vm396, %v389, 920167782
  %v403 = vsel %vm395, %v386, %v402
  %v404 = vsel %vm394, %v401, %v403
  %v405 = vsel %vm393, %v383, %v386
  %v406 = vsel %vm396, %v392, 1326507024
  %v407 = vsel %vm395, %v389, %v406
  %v408 = vsel %vm394, %v405, %v407
  %v409 = vshll.u32 %v369, 8
  %v410 = vmul.u32.u64.compose %v409, %v408
  %v411 = vextract.low.u32 %v410
  %v412 = vextract.high.u32 %v410
  %v413 = vmul.u32.u64.compose %v409, %v404
  %v414 = vextract.low.u32 %v413
  %v415 = vextract.high.u32 %v413
  %v416 = vmul.u32 %v409, %v400
  %v417 = vadd.s32 %v412, %v414
  %vm418 = vc.u32 %v412, %v414
  %v419 = vadd.s32 %v415, 1
  %v420 = vsel %vm418, %v419, %v415
  %v421 = vadd.s32 %v416, %v420
  %v422 = vadd.s32 %v421, 536870912
  %v423 = vshrl.u32 %v422, 30
  %v424 = vshll.u32 %v423, 30
  %v425 = vsub.s32 %v421, %v424
  %vm426 = vcmp.lt.s32.totalorder %v425, 0
  %v427 = vsub.s32 0, %v425
  %v428 = vsel %vm426, %v427, %v425
  %v429 = vclz %v428
  %v430 = vsub.s32 %v429, 2
  %vm431 = vcmp.gt.s32.totalorder 0, %v430
  %v432 = vsel %vm431, 0, %v430
  %v433 = vsub.s32 32, %v432
  %v434 = vshll.u32 %v425, %v432
  %v435 = vshrl.u32 %v417, %v433
  %v436 = vor.u32 %v434, %v435
  %v437 = vsub.s32 4294967266, %v432
  %v438 = vadd.s32 %v437, 127
  %v439 = vshll.u32 %v438, 23
  %v440 = vor.u32 4788187, %v439
  %v441 = vand.u32 2147483647, %v440
  %v443 = vcvt.s32.f32 %v436
  %v444 = vmul.f32 %v443, %v441
  %v445 = vxor.u32 %v444, 2147483648
  %v446 = vsel %vm363, %v445, %v444
  %v447 = vsub.s32 4, %v423
  %v448 = vsel %vm363, %v447, %v423
  %v449 = vsel %vm362, %v47, %v446
  %v450 = vsel %vm362, 0, %v448
  %v451 = vcosq.f32.pop %v449
  %v452 = vsinq.f32.pop %v449
  %vm453 = vweird.f32 %v47
  %v454 = vadd.s32 %v450, 3
  %v455 = vand.u32 %v454, 3
  %vm456 = vcmp.lt.s32.totalorder %v455, 2
  %vm457 = vcmp.eq.s32.totalorder %v455, 0
  %v458 = vxor.u32 %v452, 2147483648
  %v459 = vsel %vm457, %v451, %v458
  %vm460 = vcmp.eq.s32.totalorder %v455, 2
  %v461 = vxor.u32 %v451, 2147483648
  %v462 = vsel %vm460, %v461, %v452
  %v463 = vsel %vm456, %v459, %v462
  %v464 = vsel %vm453, nan, %v463
  %v465 = vsel %vm50, %v153, %v360
  %v466 = vsel %vm50, %v256, %v464
  %v467 = vld [vmem:[%s0] sm:$0xff]
  %v468 = vld [vmem:[%s0 + $0x8] sm:$0xff]
  %v469 = vld [vmem:[%s0 + $0x10] sm:$0xff]
  %v470 = vld [vmem:[%s0 + $0x18] sm:$0xff]
  %v471 = vld [vmem:[%s0 + $0x20] sm:$0xff]
  %v472 = vld [vmem:[%s0 + $0x28] sm:$0xff]
  %v473 = vld [vmem:[%s0 + $0x30] sm:$0xff]
  %v474 = vld [vmem:[%s0 + $0x38] sm:$0xff]
  %v475 = vld [vmem:[%s0 + $0x40] sm:$0xff]
  %v476 = vld [vmem:[%s0 + $0x48] sm:$0xff]
  %v477 = vld [vmem:[%s0 + $0x50] sm:$0xff]
  %v478 = vld [vmem:[%s0 + $0x58] sm:$0xff]
  %v479 = vpack.c.bf16 %v473, %v467
  %v480 = vpack.c.bf16 %v474, %v468
  %v481 = vpack.c.bf16 %v475, %v469
  %v482 = vpack.c.bf16 %v476, %v470
  %v483 = vpack.c.bf16 %v477, %v471
  %v484 = vpack.c.bf16 %v478, %v472
  %v485 = vld [vmem:[%s1] sm:$0xff]
  %v486 = vld [vmem:[%s1 + $0x8] sm:$0xff]
  %v487 = vld [vmem:[%s1 + $0x10] sm:$0xff]
  %v488 = vld [vmem:[%s1 + $0x18] sm:$0xff]
  %v489 = vpack.c.bf16 %v487, %v485
  %v490 = vpack.c.bf16 %v488, %v486
  %v491 = vpack.c.bf16 %v466, %v465
  %v492 = vld [vmem:[%s4] sm:$0xff]
  %v493 = vld [vmem:[%s4 + $0x8] sm:$0xff]
  %v494 = vld [vmem:[%s4 + $0x10] sm:$0xff]
  %v495 = vld [vmem:[%s4 + $0x18] sm:$0xff]
  %v496 = vld [vmem:[%s4 + $0x20] sm:$0xff]
  %v497 = vld [vmem:[%s4 + $0x28] sm:$0xff]
  %v498 = vld [vmem:[%s4 + $0x30] sm:$0xff]
  %v499 = vld [vmem:[%s4 + $0x38] sm:$0xff]
  %v500 = vld [vmem:[%s4 + $0x40] sm:$0xff]
  %v501 = vld [vmem:[%s4 + $0x48] sm:$0xff]
  %v502 = vld [vmem:[%s4 + $0x50] sm:$0xff]
  %v503 = vld [vmem:[%s4 + $0x58] sm:$0xff]
  %v504 = vld [vmem:[%s4 + $0x60] sm:$0xff]
  %v505 = vld [vmem:[%s4 + $0x68] sm:$0xff]
  %v506 = vld [vmem:[%s4 + $0x70] sm:$0xff]
  %v507 = vld [vmem:[%s4 + $0x78] sm:$0xff]
  %v508 = vld [vmem:[%s4 + $0x80] sm:$0xff]
  %v509 = vld [vmem:[%s4 + $0x88] sm:$0xff]
  %v510 = vld [vmem:[%s4 + $0x90] sm:$0xff]
  %v511 = vld [vmem:[%s4 + $0x98] sm:$0xff]
  %v512 = vld [vmem:[%s4 + $0xa0] sm:$0xff]
  %v513 = vld [vmem:[%s4 + $0xa8] sm:$0xff]
  %v514 = vld [vmem:[%s4 + $0xb0] sm:$0xff]
  %v515 = vld [vmem:[%s4 + $0xb8] sm:$0xff]
  %v516 = vld [vmem:[%s4 + $0xc0] sm:$0xff]
  %v517 = vld [vmem:[%s4 + $0xc8] sm:$0xff]
  %v518 = vld [vmem:[%s4 + $0xd0] sm:$0xff]
  %v519 = vld [vmem:[%s4 + $0xd8] sm:$0xff]
  %v520 = vld [vmem:[%s4 + $0xe0] sm:$0xff]
  %v521 = vld [vmem:[%s4 + $0xe8] sm:$0xff]
  %v522 = vld [vmem:[%s4 + $0xf0] sm:$0xff]
  %v523 = vld [vmem:[%s4 + $0xf8] sm:$0xff]
  %v524 = vld [vmem:[%s4 + $0x100] sm:$0xff]
  %v525 = vld [vmem:[%s4 + $0x108] sm:$0xff]
  %v526 = vld [vmem:[%s4 + $0x110] sm:$0xff]
  %v527 = vld [vmem:[%s4 + $0x118] sm:$0xff]
  %v528 = vld [vmem:[%s4 + $0x120] sm:$0xff]
  %v529 = vld [vmem:[%s4 + $0x128] sm:$0xff]
  %v530 = vld [vmem:[%s4 + $0x130] sm:$0xff]
  %v531 = vld [vmem:[%s4 + $0x138] sm:$0xff]
  %v532 = vld [vmem:[%s4 + $0x140] sm:$0xff]
  %v533 = vld [vmem:[%s4 + $0x148] sm:$0xff]
  %v534 = vld [vmem:[%s4 + $0x150] sm:$0xff]
  %v535 = vld [vmem:[%s4 + $0x158] sm:$0xff]
  %v536 = vld [vmem:[%s4 + $0x160] sm:$0xff]
  %v537 = vld [vmem:[%s4 + $0x168] sm:$0xff]
  %v538 = vld [vmem:[%s4 + $0x170] sm:$0xff]
  %v539 = vld [vmem:[%s4 + $0x178] sm:$0xff]
  %v540 = vld [vmem:[%s4 + $0x180] sm:$0xff]
  %v541 = vld [vmem:[%s4 + $0x188] sm:$0xff]
  %v542 = vld [vmem:[%s4 + $0x190] sm:$0xff]
  %v543 = vld [vmem:[%s4 + $0x198] sm:$0xff]
  %v544 = vld [vmem:[%s4 + $0x1a0] sm:$0xff]
  %v545 = vld [vmem:[%s4 + $0x1a8] sm:$0xff]
  %v546 = vld [vmem:[%s4 + $0x1b0] sm:$0xff]
  %v547 = vld [vmem:[%s4 + $0x1b8] sm:$0xff]
  %v548 = vld [vmem:[%s4 + $0x1c0] sm:$0xff]
  %v549 = vld [vmem:[%s4 + $0x1c8] sm:$0xff]
  %v550 = vld [vmem:[%s4 + $0x1d0] sm:$0xff]
  %v551 = vld [vmem:[%s4 + $0x1d8] sm:$0xff]
  %v552 = vld [vmem:[%s4 + $0x1e0] sm:$0xff]
  %v553 = vld [vmem:[%s4 + $0x1e8] sm:$0xff]
  %v554 = vld [vmem:[%s4 + $0x1f0] sm:$0xff]
  %v555 = vld [vmem:[%s4 + $0x1f8] sm:$0xff]
  %v556 = vld [vmem:[%s4 + $0x200] sm:$0xff]
  %v557 = vld [vmem:[%s4 + $0x208] sm:$0xff]
  %v558 = vld [vmem:[%s4 + $0x210] sm:$0xff]
  %v559 = vld [vmem:[%s4 + $0x218] sm:$0xff]
  %v560 = vld [vmem:[%s4 + $0x220] sm:$0xff]
  %v561 = vld [vmem:[%s4 + $0x228] sm:$0xff]
  %v562 = vld [vmem:[%s4 + $0x230] sm:$0xff]
  %v563 = vld [vmem:[%s4 + $0x238] sm:$0xff]
  %v564 = vld [vmem:[%s4 + $0x240] sm:$0xff]
  %v565 = vld [vmem:[%s4 + $0x248] sm:$0xff]
  %v566 = vld [vmem:[%s4 + $0x250] sm:$0xff]
  %v567 = vld [vmem:[%s4 + $0x258] sm:$0xff]
  %v568 = vld [vmem:[%s4 + $0x260] sm:$0xff]
  %v569 = vld [vmem:[%s4 + $0x268] sm:$0xff]
  %v570 = vld [vmem:[%s4 + $0x270] sm:$0xff]
  %v571 = vld [vmem:[%s4 + $0x278] sm:$0xff]
  %v572 = vld [vmem:[%s4 + $0x280] sm:$0xff]
  %v573 = vld [vmem:[%s4 + $0x288] sm:$0xff]
  %v574 = vld [vmem:[%s4 + $0x290] sm:$0xff]
  %v575 = vld [vmem:[%s4 + $0x298] sm:$0xff]
  %v576 = vld [vmem:[%s4 + $0x2a0] sm:$0xff]
  %v577 = vld [vmem:[%s4 + $0x2a8] sm:$0xff]
  %v578 = vld [vmem:[%s4 + $0x2b0] sm:$0xff]
  %v579 = vld [vmem:[%s4 + $0x2b8] sm:$0xff]
  %v580 = vld [vmem:[%s4 + $0x2c0] sm:$0xff]
  %v581 = vld [vmem:[%s4 + $0x2c8] sm:$0xff]
  %v582 = vld [vmem:[%s4 + $0x2d0] sm:$0xff]
  %v583 = vld [vmem:[%s4 + $0x2d8] sm:$0xff]
  %v584 = vld [vmem:[%s4 + $0x2e0] sm:$0xff]
  %v585 = vld [vmem:[%s4 + $0x2e8] sm:$0xff]
  %v586 = vld [vmem:[%s4 + $0x2f0] sm:$0xff]
  %v587 = vld [vmem:[%s4 + $0x2f8] sm:$0xff]
  %v588 = vld [vmem:[%s4 + $0x300] sm:$0xff]
  %v589 = vld [vmem:[%s4 + $0x308] sm:$0xff]
  %v590 = vld [vmem:[%s4 + $0x310] sm:$0xff]
  %v591 = vld [vmem:[%s4 + $0x318] sm:$0xff]
  %v592 = vld [vmem:[%s4 + $0x320] sm:$0xff]
  %v593 = vld [vmem:[%s4 + $0x328] sm:$0xff]
  %v594 = vld [vmem:[%s4 + $0x330] sm:$0xff]
  %v595 = vld [vmem:[%s4 + $0x338] sm:$0xff]
  %v596 = vld [vmem:[%s4 + $0x340] sm:$0xff]
  %v597 = vld [vmem:[%s4 + $0x348] sm:$0xff]
  %v598 = vld [vmem:[%s4 + $0x350] sm:$0xff]
  %v599 = vld [vmem:[%s4 + $0x358] sm:$0xff]
  %v600 = vld [vmem:[%s4 + $0x360] sm:$0xff]
  %v601 = vld [vmem:[%s4 + $0x368] sm:$0xff]
  %v602 = vld [vmem:[%s4 + $0x370] sm:$0xff]
  %v603 = vld [vmem:[%s4 + $0x378] sm:$0xff]
  %v604 = vld [vmem:[%s4 + $0x380] sm:$0xff]
  %v605 = vld [vmem:[%s4 + $0x388] sm:$0xff]
  %v606 = vld [vmem:[%s4 + $0x390] sm:$0xff]
  %v607 = vld [vmem:[%s4 + $0x398] sm:$0xff]
  %v608 = vld [vmem:[%s4 + $0x3a0] sm:$0xff]
  %v609 = vld [vmem:[%s4 + $0x3a8] sm:$0xff]
  %v610 = vld [vmem:[%s4 + $0x3b0] sm:$0xff]
  %v611 = vld [vmem:[%s4 + $0x3b8] sm:$0xff]
  %v612 = vld [vmem:[%s4 + $0x3c0] sm:$0xff]
  %v613 = vld [vmem:[%s4 + $0x3c8] sm:$0xff]
  %v614 = vld [vmem:[%s4 + $0x3d0] sm:$0xff]
  %v615 = vld [vmem:[%s4 + $0x3d8] sm:$0xff]
  %v616 = vld [vmem:[%s4 + $0x3e0] sm:$0xff]
  %v617 = vld [vmem:[%s4 + $0x3e8] sm:$0xff]
  %v618 = vld [vmem:[%s4 + $0x3f0] sm:$0xff]
  %v619 = vld [vmem:[%s4 + $0x3f8] sm:$0xff]
  %v620 = vld [vmem:[%s4 + $0x400] sm:$0xff]
  %v621 = vld [vmem:[%s4 + $0x408] sm:$0xff]
  %v622 = vld [vmem:[%s4 + $0x410] sm:$0xff]
  %v623 = vld [vmem:[%s4 + $0x418] sm:$0xff]
  %v660 = vunpack.c.l.b16 %v588
  %v661 = vunpack.c.h.b16 %v588
  %v662 = vunpack.c.l.b16 %v589
  %v663 = vunpack.c.h.b16 %v589
  %v664 = vunpack.c.l.b16 %v590
  %v665 = vunpack.c.h.b16 %v590
  %v666 = vunpack.c.l.b16 %v591
  %v667 = vunpack.c.h.b16 %v591
  %v668 = vunpack.c.l.b16 %v592
  %v669 = vunpack.c.h.b16 %v592
  %v670 = vunpack.c.l.b16 %v593
  %v671 = vunpack.c.h.b16 %v593
  %v672 = vunpack.c.l.b16 %v594
  %v673 = vunpack.c.h.b16 %v594
  %v674 = vunpack.c.l.b16 %v595
  %v675 = vunpack.c.h.b16 %v595
  %v676 = vunpack.c.l.b16 %v596
  %v677 = vunpack.c.h.b16 %v596
  %v678 = vunpack.c.l.b16 %v597
  %v679 = vunpack.c.h.b16 %v597
  %v680 = vunpack.c.l.b16 %v598
  %v681 = vunpack.c.h.b16 %v598
  %v682 = vunpack.c.l.b16 %v599
  %v683 = vunpack.c.h.b16 %v599
  %v684 = vunpack.c.l.b16 %v600
  %v685 = vunpack.c.h.b16 %v600
  %v686 = vunpack.c.l.b16 %v601
  %v687 = vunpack.c.h.b16 %v601
  %v688 = vunpack.c.l.b16 %v602
  %v689 = vunpack.c.h.b16 %v602
  %v690 = vunpack.c.l.b16 %v603
  %v691 = vunpack.c.h.b16 %v603
  %v692 = vunpack.c.l.b16 %v604
  %v693 = vunpack.c.h.b16 %v604
  %v694 = vunpack.c.l.b16 %v605
  %v695 = vunpack.c.h.b16 %v605
  %v696 = vunpack.c.l.b16 %v606
  %v697 = vunpack.c.h.b16 %v606
  %v698 = vunpack.c.l.b16 %v607
  %v699 = vunpack.c.h.b16 %v607
  %v700 = vunpack.c.l.b16 %v608
  %v701 = vunpack.c.h.b16 %v608
  %v702 = vunpack.c.l.b16 %v609
  %v703 = vunpack.c.h.b16 %v609
  %v704 = vunpack.c.l.b16 %v610
  %v705 = vunpack.c.h.b16 %v610
  %v706 = vunpack.c.l.b16 %v611
  %v707 = vunpack.c.h.b16 %v611
  %v708 = vunpack.c.l.b16 %v612
  %v709 = vunpack.c.h.b16 %v612
  %v710 = vunpack.c.l.b16 %v613
  %v711 = vunpack.c.h.b16 %v613
  %v712 = vunpack.c.l.b16 %v614
  %v713 = vunpack.c.h.b16 %v614
  %v714 = vunpack.c.l.b16 %v615
  %v715 = vunpack.c.h.b16 %v615
  %v716 = vunpack.c.l.b16 %v616
  %v717 = vunpack.c.h.b16 %v616
  %v718 = vunpack.c.l.b16 %v617
  %v719 = vunpack.c.h.b16 %v617
  %v720 = vunpack.c.l.b16 %v618
  %v721 = vunpack.c.h.b16 %v618
  %v722 = vunpack.c.l.b16 %v619
  %v723 = vunpack.c.h.b16 %v619
  %v724 = vunpack.c.l.b16 %v620
  %v725 = vunpack.c.h.b16 %v620
  %v726 = vunpack.c.l.b16 %v621
  %v727 = vunpack.c.h.b16 %v621
  %v728 = vunpack.c.l.b16 %v622
  %v729 = vunpack.c.h.b16 %v622
  %v730 = vunpack.c.l.b16 %v623
  %v731 = vunpack.c.h.b16 %v623
  %v732 = vpack.c.b16 %v662, %v660
  %v733 = vpack.c.b16 %v663, %v661
  %v734 = vpack.c.b16 %v666, %v664
  %v735 = vpack.c.b16 %v667, %v665
  %v736 = vpack.c.b16 %v670, %v668
  %v737 = vpack.c.b16 %v671, %v669
  %v738 = vpack.c.b16 %v674, %v672
  %v739 = vpack.c.b16 %v675, %v673
  %v740 = vpack.c.b16 %v678, %v676
  %v741 = vpack.c.b16 %v679, %v677
  %v742 = vpack.c.b16 %v682, %v680
  %v743 = vpack.c.b16 %v683, %v681
  %v744 = vpack.c.b16 %v686, %v684
  %v745 = vpack.c.b16 %v687, %v685
  %v746 = vpack.c.b16 %v690, %v688
  %v747 = vpack.c.b16 %v691, %v689
  %v748 = vpack.c.b16 %v694, %v692
  %v749 = vpack.c.b16 %v695, %v693
  %v750 = vpack.c.b16 %v698, %v696
  %v751 = vpack.c.b16 %v699, %v697
  %v752 = vpack.c.b16 %v702, %v700
  %v753 = vpack.c.b16 %v703, %v701
  %v754 = vpack.c.b16 %v706, %v704
  %v755 = vpack.c.b16 %v707, %v705
  %v756 = vpack.c.b16 %v710, %v708
  %v757 = vpack.c.b16 %v711, %v709
  %v758 = vpack.c.b16 %v714, %v712
  %v759 = vpack.c.b16 %v715, %v713
  %v760 = vpack.c.b16 %v718, %v716
  %v761 = vpack.c.b16 %v719, %v717
  %v762 = vpack.c.b16 %v722, %v720
  %v763 = vpack.c.b16 %v723, %v721
  %v764 = vpack.c.b16 %v726, %v724
  %v765 = vpack.c.b16 %v727, %v725
  %v766 = vpack.c.b16 %v730, %v728
  %v767 = vpack.c.b16 %v731, %v729
  %vm804 = vcmask 261120
  %v806 = vsel %vm804, %v491, 0
  %808 = vmatprep.subr.bf16.mxu0 %v733
  %809 = vmatpush1.bf16.msra.mxu0 %v732
  %810 = vmatprep.subr.bf16.mxu0 %v735
  %811 = vmatpush1.bf16.msra.mxu0 %v734
  %812 = vmatprep.subr.bf16.mxu0 %v737
  %813 = vmatpush1.bf16.msra.mxu0 %v736
  %814 = vmatprep.subr.bf16.mxu0 %v739
  %815 = vmatpush1.bf16.msra.mxu0 %v738
  %816 = vmatprep.subr.bf16.mxu0 %v741
  %817 = vmatpush1.bf16.msra.mxu0 %v740
  %818 = vmatprep.subr.bf16.mxu0 %v743
  %819 = vmatpush1.bf16.msra.mxu0 %v742
  %820 = vmatprep.subr.bf16.mxu0 %v745
  %821 = vmatpush1.bf16.msra.mxu0 %v744
  %822 = vmatprep.subr.bf16.mxu0 %v747
  %823 = vmatpush1.bf16.msra.mxu0 %v746
  %824 = vmatprep.subr.bf16.mxu0 %v749
  %825 = vmatpush1.bf16.msra.mxu0 %v748
  %826 = vmatprep.subr.bf16.mxu0 %v751
  %827 = vmatpush1.bf16.msra.mxu0 %v750
  %828 = vmatprep.subr.bf16.mxu0 %v753
  %829 = vmatpush1.bf16.msra.mxu0 %v752
  %830 = vmatprep.subr.bf16.mxu0 %v755
  %831 = vmatpush1.bf16.msra.mxu0 %v754
  %832 = vmatprep.subr.bf16.mxu0 %v757
  %833 = vmatpush1.bf16.msra.mxu0 %v756
  %834 = vmatprep.subr.bf16.mxu0 %v759
  %835 = vmatpush1.bf16.msra.mxu0 %v758
  %836 = vmatprep.subr.bf16.mxu0 %v761
  %837 = vmatpush1.bf16.msra.mxu0 %v760
  %838 = vmatprep.subr.bf16.mxu0 %v763
  %839 = vmatpush1.bf16.msra.mxu0 %v762
  %840 = vmatprep.mubr.bf16.mxu0 %v490
  %841 = vmatmul.mubr.bf16.gmra.mrb[0].mxu0 %v489
  %v842 = vpop.f32.mrb[0].mxu0
  %v843 = vadd.f32 0.0, %v842
  %v844 = vpop.f32.mrb[0].mxu0
  %v845 = vadd.f32 0.0, %v844
  %v846 = vpop.f32.mrb[0].mxu0
  %v847 = vadd.f32 0.0, %v846
  %v848 = vpop.f32.mrb[0].mxu0
  %v849 = vadd.f32 0.0, %v848
  %850 = vdwg.mxu0
  %851 = vmatprep.subr.bf16.mxu0 %v765
  %852 = vmatpush1.bf16.msra.mxu0 %v764
  %853 = vmatprep.subr.bf16.mxu0 %v767
  %854 = vmatpush1.bf16.msra.mxu0 %v766
  %855 = vmatprep.subr.bf16.mxu0 0
  %856 = vmatpush1.bf16.msra.mxu0 0
  %857 = vmatprep.subr.bf16.mxu0 0
  %858 = vmatpush1.bf16.msra.mxu0 0
  %859 = vmatprep.subr.bf16.mxu0 0
  %860 = vmatpush1.bf16.msra.mxu0 0
  %861 = vmatprep.subr.bf16.mxu0 0
  %862 = vmatpush1.bf16.msra.mxu0 0
  %863 = vmatprep.subr.bf16.mxu0 0
  %864 = vmatpush1.bf16.msra.mxu0 0
  %865 = vmatprep.subr.bf16.mxu0 0
  %866 = vmatpush1.bf16.msra.mxu0 0
  %867 = vmatprep.subr.bf16.mxu0 0
  %868 = vmatpush1.bf16.msra.mxu0 0
  %869 = vmatprep.subr.bf16.mxu0 0
  %870 = vmatpush1.bf16.msra.mxu0 0
  %871 = vmatprep.subr.bf16.mxu0 0
  %872 = vmatpush1.bf16.msra.mxu0 0
  %873 = vmatprep.subr.bf16.mxu0 0
  %874 = vmatpush1.bf16.msra.mxu0 0
  %875 = vmatprep.subr.bf16.mxu0 0
  %876 = vmatpush1.bf16.msra.mxu0 0
  %877 = vmatprep.subr.bf16.mxu0 0
  %878 = vmatpush1.bf16.msra.mxu0 0
  %879 = vmatprep.subr.bf16.mxu0 0
  %880 = vmatpush1.bf16.msra.mxu0 0
  %881 = vmatprep.subr.bf16.mxu0 0
  %882 = vmatpush1.bf16.msra.mxu0 0
  %883 = vmatprep.mubr.bf16.mxu0 0
  %884 = vmatmul.mubr.bf16.gmra.mrb[0].mxu0 %v806
  %v885 = vpop.f32.mrb[0].mxu0
  %v886 = vadd.f32 %v843, %v885
  %v887 = vpop.f32.mrb[0].mxu0
  %v888 = vadd.f32 %v845, %v887
  %v889 = vpop.f32.mrb[0].mxu0
  %v890 = vadd.f32 %v847, %v889
  %v891 = vpop.f32.mrb[0].mxu0
  %v892 = vadd.f32 %v849, %v891
  %893 = vdwg.mxu0
  %v990 = vunpack.c.l.b16 %v492
  %v991 = vunpack.c.h.b16 %v492
  %v992 = vunpack.c.l.b16 %v493
  %v993 = vunpack.c.h.b16 %v493
  %v994 = vunpack.c.l.b16 %v494
  %v995 = vunpack.c.h.b16 %v494
  %v996 = vunpack.c.l.b16 %v495
  %v997 = vunpack.c.h.b16 %v495
  %v998 = vunpack.c.l.b16 %v496
  %v999 = vunpack.c.h.b16 %v496
  %v1000 = vunpack.c.l.b16 %v497
  %v1001 = vunpack.c.h.b16 %v497
  %v1002 = vunpack.c.l.b16 %v498
  %v1003 = vunpack.c.h.b16 %v498
  %v1004 = vunpack.c.l.b16 %v499
  %v1005 = vunpack.c.h.b16 %v499
  %v1006 = vunpack.c.l.b16 %v500
  %v1007 = vunpack.c.h.b16 %v500
  %v1008 = vunpack.c.l.b16 %v501
  %v1009 = vunpack.c.h.b16 %v501
  %v1010 = vunpack.c.l.b16 %v502
  %v1011 = vunpack.c.h.b16 %v502
  %v1012 = vunpack.c.l.b16 %v503
  %v1013 = vunpack.c.h.b16 %v503
  %v1014 = vunpack.c.l.b16 %v504
  %v1015 = vunpack.c.h.b16 %v504
  %v1016 = vunpack.c.l.b16 %v505
  %v1017 = vunpack.c.h.b16 %v505
  %v1018 = vunpack.c.l.b16 %v506
  %v1019 = vunpack.c.h.b16 %v506
  %v1020 = vunpack.c.l.b16 %v507
  %v1021 = vunpack.c.h.b16 %v507
  %v1022 = vunpack.c.l.b16 %v508
  %v1023 = vunpack.c.h.b16 %v508
  %v1024 = vunpack.c.l.b16 %v509
  %v1025 = vunpack.c.h.b16 %v509
  %v1026 = vunpack.c.l.b16 %v510
  %v1027 = vunpack.c.h.b16 %v510
  %v1028 = vunpack.c.l.b16 %v511
  %v1029 = vunpack.c.h.b16 %v511
  %v1030 = vunpack.c.l.b16 %v512
  %v1031 = vunpack.c.h.b16 %v512
  %v1032 = vunpack.c.l.b16 %v513
  %v1033 = vunpack.c.h.b16 %v513
  %v1034 = vunpack.c.l.b16 %v514
  %v1035 = vunpack.c.h.b16 %v514
  %v1036 = vunpack.c.l.b16 %v515
  %v1037 = vunpack.c.h.b16 %v515
  %v1038 = vunpack.c.l.b16 %v516
  %v1039 = vunpack.c.h.b16 %v516
  %v1040 = vunpack.c.l.b16 %v517
  %v1041 = vunpack.c.h.b16 %v517
  %v1042 = vunpack.c.l.b16 %v518
  %v1043 = vunpack.c.h.b16 %v518
  %v1044 = vunpack.c.l.b16 %v519
  %v1045 = vunpack.c.h.b16 %v519
  %v1046 = vunpack.c.l.b16 %v520
  %v1047 = vunpack.c.h.b16 %v520
  %v1048 = vunpack.c.l.b16 %v521
  %v1049 = vunpack.c.h.b16 %v521
  %v1050 = vunpack.c.l.b16 %v522
  %v1051 = vunpack.c.h.b16 %v522
  %v1052 = vunpack.c.l.b16 %v523
  %v1053 = vunpack.c.h.b16 %v523
  %v1054 = vunpack.c.l.b16 %v524
  %v1055 = vunpack.c.h.b16 %v524
  %v1056 = vunpack.c.l.b16 %v525
  %v1057 = vunpack.c.h.b16 %v525
  %v1058 = vunpack.c.l.b16 %v526
  %v1059 = vunpack.c.h.b16 %v526
  %v1060 = vunpack.c.l.b16 %v527
  %v1061 = vunpack.c.h.b16 %v527
  %v1062 = vunpack.c.l.b16 %v528
  %v1063 = vunpack.c.h.b16 %v528
  %v1064 = vunpack.c.l.b16 %v529
  %v1065 = vunpack.c.h.b16 %v529
  %v1066 = vunpack.c.l.b16 %v530
  %v1067 = vunpack.c.h.b16 %v530
  %v1068 = vunpack.c.l.b16 %v531
  %v1069 = vunpack.c.h.b16 %v531
  %v1070 = vunpack.c.l.b16 %v532
  %v1071 = vunpack.c.h.b16 %v532
  %v1072 = vunpack.c.l.b16 %v533
  %v1073 = vunpack.c.h.b16 %v533
  %v1074 = vunpack.c.l.b16 %v534
  %v1075 = vunpack.c.h.b16 %v534
  %v1076 = vunpack.c.l.b16 %v535
  %v1077 = vunpack.c.h.b16 %v535
  %v1078 = vunpack.c.l.b16 %v536
  %v1079 = vunpack.c.h.b16 %v536
  %v1080 = vunpack.c.l.b16 %v537
  %v1081 = vunpack.c.h.b16 %v537
  %v1082 = vunpack.c.l.b16 %v538
  %v1083 = vunpack.c.h.b16 %v538
  %v1084 = vunpack.c.l.b16 %v539
  %v1085 = vunpack.c.h.b16 %v539
  %v1086 = vunpack.c.l.b16 %v540
  %v1087 = vunpack.c.h.b16 %v540
  %v1088 = vunpack.c.l.b16 %v541
  %v1089 = vunpack.c.h.b16 %v541
  %v1090 = vunpack.c.l.b16 %v542
  %v1091 = vunpack.c.h.b16 %v542
  %v1092 = vunpack.c.l.b16 %v543
  %v1093 = vunpack.c.h.b16 %v543
  %v1094 = vunpack.c.l.b16 %v544
  %v1095 = vunpack.c.h.b16 %v544
  %v1096 = vunpack.c.l.b16 %v545
  %v1097 = vunpack.c.h.b16 %v545
  %v1098 = vunpack.c.l.b16 %v546
  %v1099 = vunpack.c.h.b16 %v546
  %v1100 = vunpack.c.l.b16 %v547
  %v1101 = vunpack.c.h.b16 %v547
  %v1102 = vunpack.c.l.b16 %v548
  %v1103 = vunpack.c.h.b16 %v548
  %v1104 = vunpack.c.l.b16 %v549
  %v1105 = vunpack.c.h.b16 %v549
  %v1106 = vunpack.c.l.b16 %v550
  %v1107 = vunpack.c.h.b16 %v550
  %v1108 = vunpack.c.l.b16 %v551
  %v1109 = vunpack.c.h.b16 %v551
  %v1110 = vunpack.c.l.b16 %v552
  %v1111 = vunpack.c.h.b16 %v552
  %v1112 = vunpack.c.l.b16 %v553
  %v1113 = vunpack.c.h.b16 %v553
  %v1114 = vunpack.c.l.b16 %v554
  %v1115 = vunpack.c.h.b16 %v554
  %v1116 = vunpack.c.l.b16 %v555
  %v1117 = vunpack.c.h.b16 %v555
  %v1118 = vunpack.c.l.b16 %v556
  %v1119 = vunpack.c.h.b16 %v556
  %v1120 = vunpack.c.l.b16 %v557
  %v1121 = vunpack.c.h.b16 %v557
  %v1122 = vunpack.c.l.b16 %v558
  %v1123 = vunpack.c.h.b16 %v558
  %v1124 = vunpack.c.l.b16 %v559
  %v1125 = vunpack.c.h.b16 %v559
  %v1126 = vunpack.c.l.b16 %v560
  %v1127 = vunpack.c.h.b16 %v560
  %v1128 = vunpack.c.l.b16 %v561
  %v1129 = vunpack.c.h.b16 %v561
  %v1130 = vunpack.c.l.b16 %v562
  %v1131 = vunpack.c.h.b16 %v562
  %v1132 = vunpack.c.l.b16 %v563
  %v1133 = vunpack.c.h.b16 %v563
  %v1134 = vunpack.c.l.b16 %v564
  %v1135 = vunpack.c.h.b16 %v564
  %v1136 = vunpack.c.l.b16 %v565
  %v1137 = vunpack.c.h.b16 %v565
  %v1138 = vunpack.c.l.b16 %v566
  %v1139 = vunpack.c.h.b16 %v566
  %v1140 = vunpack.c.l.b16 %v567
  %v1141 = vunpack.c.h.b16 %v567
  %v1142 = vunpack.c.l.b16 %v568
  %v1143 = vunpack.c.h.b16 %v568
  %v1144 = vunpack.c.l.b16 %v569
  %v1145 = vunpack.c.h.b16 %v569
  %v1146 = vunpack.c.l.b16 %v570
  %v1147 = vunpack.c.h.b16 %v570
  %v1148 = vunpack.c.l.b16 %v571
  %v1149 = vunpack.c.h.b16 %v571
  %v1150 = vunpack.c.l.b16 %v572
  %v1151 = vunpack.c.h.b16 %v572
  %v1152 = vunpack.c.l.b16 %v573
  %v1153 = vunpack.c.h.b16 %v573
  %v1154 = vunpack.c.l.b16 %v574
  %v1155 = vunpack.c.h.b16 %v574
  %v1156 = vunpack.c.l.b16 %v575
  %v1157 = vunpack.c.h.b16 %v575
  %v1158 = vunpack.c.l.b16 %v576
  %v1159 = vunpack.c.h.b16 %v576
  %v1160 = vunpack.c.l.b16 %v577
  %v1161 = vunpack.c.h.b16 %v577
  %v1162 = vunpack.c.l.b16 %v578
  %v1163 = vunpack.c.h.b16 %v578
  %v1164 = vunpack.c.l.b16 %v579
  %v1165 = vunpack.c.h.b16 %v579
  %v1166 = vunpack.c.l.b16 %v580
  %v1167 = vunpack.c.h.b16 %v580
  %v1168 = vunpack.c.l.b16 %v581
  %v1169 = vunpack.c.h.b16 %v581
  %v1170 = vunpack.c.l.b16 %v582
  %v1171 = vunpack.c.h.b16 %v582
  %v1172 = vunpack.c.l.b16 %v583
  %v1173 = vunpack.c.h.b16 %v583
  %v1174 = vunpack.c.l.b16 %v584
  %v1175 = vunpack.c.h.b16 %v584
  %v1176 = vunpack.c.l.b16 %v585
  %v1177 = vunpack.c.h.b16 %v585
  %v1178 = vunpack.c.l.b16 %v586
  %v1179 = vunpack.c.h.b16 %v586
  %v1180 = vunpack.c.l.b16 %v587
  %v1181 = vunpack.c.h.b16 %v587
  %v1182 = vpack.c.b16 %v992, %v990
  %v1183 = vpack.c.b16 %v993, %v991
  %v1184 = vpack.c.b16 %v996, %v994
  %v1185 = vpack.c.b16 %v997, %v995
  %v1186 = vpack.c.b16 %v1000, %v998
  %v1187 = vpack.c.b16 %v1001, %v999
  %v1188 = vpack.c.b16 %v1004, %v1002
  %v1189 = vpack.c.b16 %v1005, %v1003
  %v1190 = vpack.c.b16 %v1008, %v1006
  %v1191 = vpack.c.b16 %v1009, %v1007
  %v1192 = vpack.c.b16 %v1012, %v1010
  %v1193 = vpack.c.b16 %v1013, %v1011
  %v1194 = vpack.c.b16 %v1016, %v1014
  %v1195 = vpack.c.b16 %v1017, %v1015
  %v1196 = vpack.c.b16 %v1020, %v1018
  %v1197 = vpack.c.b16 %v1021, %v1019
  %v1198 = vpack.c.b16 %v1024, %v1022
  %v1199 = vpack.c.b16 %v1025, %v1023
  %v1200 = vpack.c.b16 %v1028, %v1026
  %v1201 = vpack.c.b16 %v1029, %v1027
  %v1202 = vpack.c.b16 %v1032, %v1030
  %v1203 = vpack.c.b16 %v1033, %v1031
  %v1204 = vpack.c.b16 %v1036, %v1034
  %v1205 = vpack.c.b16 %v1037, %v1035
  %v1206 = vpack.c.b16 %v1040, %v1038
  %v1207 = vpack.c.b16 %v1041, %v1039
  %v1208 = vpack.c.b16 %v1044, %v1042
  %v1209 = vpack.c.b16 %v1045, %v1043
  %v1210 = vpack.c.b16 %v1048, %v1046
  %v1211 = vpack.c.b16 %v1049, %v1047
  %v1212 = vpack.c.b16 %v1052, %v1050
  %v1213 = vpack.c.b16 %v1053, %v1051
  %v1214 = vpack.c.b16 %v1056, %v1054
  %v1215 = vpack.c.b16 %v1057, %v1055
  %v1216 = vpack.c.b16 %v1060, %v1058
  %v1217 = vpack.c.b16 %v1061, %v1059
  %v1218 = vpack.c.b16 %v1064, %v1062
  %v1219 = vpack.c.b16 %v1065, %v1063
  %v1220 = vpack.c.b16 %v1068, %v1066
  %v1221 = vpack.c.b16 %v1069, %v1067
  %v1222 = vpack.c.b16 %v1072, %v1070
  %v1223 = vpack.c.b16 %v1073, %v1071
  %v1224 = vpack.c.b16 %v1076, %v1074
  %v1225 = vpack.c.b16 %v1077, %v1075
  %v1226 = vpack.c.b16 %v1080, %v1078
  %v1227 = vpack.c.b16 %v1081, %v1079
  %v1228 = vpack.c.b16 %v1084, %v1082
  %v1229 = vpack.c.b16 %v1085, %v1083
  %v1230 = vpack.c.b16 %v1088, %v1086
  %v1231 = vpack.c.b16 %v1089, %v1087
  %v1232 = vpack.c.b16 %v1092, %v1090
  %v1233 = vpack.c.b16 %v1093, %v1091
  %v1234 = vpack.c.b16 %v1096, %v1094
  %v1235 = vpack.c.b16 %v1097, %v1095
  %v1236 = vpack.c.b16 %v1100, %v1098
  %v1237 = vpack.c.b16 %v1101, %v1099
  %v1238 = vpack.c.b16 %v1104, %v1102
  %v1239 = vpack.c.b16 %v1105, %v1103
  %v1240 = vpack.c.b16 %v1108, %v1106
  %v1241 = vpack.c.b16 %v1109, %v1107
  %v1242 = vpack.c.b16 %v1112, %v1110
  %v1243 = vpack.c.b16 %v1113, %v1111
  %v1244 = vpack.c.b16 %v1116, %v1114
  %v1245 = vpack.c.b16 %v1117, %v1115
  %v1246 = vpack.c.b16 %v1120, %v1118
  %v1247 = vpack.c.b16 %v1121, %v1119
  %v1248 = vpack.c.b16 %v1124, %v1122
  %v1249 = vpack.c.b16 %v1125, %v1123
  %v1250 = vpack.c.b16 %v1128, %v1126
  %v1251 = vpack.c.b16 %v1129, %v1127
  %v1252 = vpack.c.b16 %v1132, %v1130
  %v1253 = vpack.c.b16 %v1133, %v1131
  %v1254 = vpack.c.b16 %v1136, %v1134
  %v1255 = vpack.c.b16 %v1137, %v1135
  %v1256 = vpack.c.b16 %v1140, %v1138
  %v1257 = vpack.c.b16 %v1141, %v1139
  %v1258 = vpack.c.b16 %v1144, %v1142
  %v1259 = vpack.c.b16 %v1145, %v1143
  %v1260 = vpack.c.b16 %v1148, %v1146
  %v1261 = vpack.c.b16 %v1149, %v1147
  %v1262 = vpack.c.b16 %v1152, %v1150
  %v1263 = vpack.c.b16 %v1153, %v1151
  %v1264 = vpack.c.b16 %v1156, %v1154
  %v1265 = vpack.c.b16 %v1157, %v1155
  %v1266 = vpack.c.b16 %v1160, %v1158
  %v1267 = vpack.c.b16 %v1161, %v1159
  %v1268 = vpack.c.b16 %v1164, %v1162
  %v1269 = vpack.c.b16 %v1165, %v1163
  %v1270 = vpack.c.b16 %v1168, %v1166
  %v1271 = vpack.c.b16 %v1169, %v1167
  %v1272 = vpack.c.b16 %v1172, %v1170
  %v1273 = vpack.c.b16 %v1173, %v1171
  %v1274 = vpack.c.b16 %v1176, %v1174
  %v1275 = vpack.c.b16 %v1177, %v1175
  %v1276 = vpack.c.b16 %v1180, %v1178
  %v1277 = vpack.c.b16 %v1181, %v1179
  %1374 = vmatprep.subr.bf16.mxu0 %v1183
  %1375 = vmatpush1.bf16.msra.mxu0 %v1182
  %1376 = vmatprep.subr.bf16.mxu0 %v1185
  %1377 = vmatpush1.bf16.msra.mxu0 %v1184
  %1378 = vmatprep.subr.bf16.mxu0 %v1187
  %1379 = vmatpush1.bf16.msra.mxu0 %v1186
  %1380 = vmatprep.subr.bf16.mxu0 %v1189
  %1381 = vmatpush1.bf16.msra.mxu0 %v1188
  %1382 = vmatprep.subr.bf16.mxu0 %v1191
  %1383 = vmatpush1.bf16.msra.mxu0 %v1190
  %1384 = vmatprep.subr.bf16.mxu0 %v1193
  %1385 = vmatpush1.bf16.msra.mxu0 %v1192
  %1386 = vmatprep.subr.bf16.mxu0 %v1195
  %1387 = vmatpush1.bf16.msra.mxu0 %v1194
  %1388 = vmatprep.subr.bf16.mxu0 %v1197
  %1389 = vmatpush1.bf16.msra.mxu0 %v1196
  %1390 = vmatprep.subr.bf16.mxu0 %v1199
  %1391 = vmatpush1.bf16.msra.mxu0 %v1198
  %1392 = vmatprep.subr.bf16.mxu0 %v1201
  %1393 = vmatpush1.bf16.msra.mxu0 %v1200
  %1394 = vmatprep.subr.bf16.mxu0 %v1203
  %1395 = vmatpush1.bf16.msra.mxu0 %v1202
  %1396 = vmatprep.subr.bf16.mxu0 %v1205
  %1397 = vmatpush1.bf16.msra.mxu0 %v1204
  %1398 = vmatprep.subr.bf16.mxu0 %v1207
  %1399 = vmatpush1.bf16.msra.mxu0 %v1206
  %1400 = vmatprep.subr.bf16.mxu0 %v1209
  %1401 = vmatpush1.bf16.msra.mxu0 %v1208
  %1402 = vmatprep.subr.bf16.mxu0 %v1211
  %1403 = vmatpush1.bf16.msra.mxu0 %v1210
  %1404 = vmatprep.subr.bf16.mxu0 %v1213
  %1405 = vmatpush1.bf16.msra.mxu0 %v1212
  %1406 = vmatprep.mubr.bf16.mxu0 %v480
  %1407 = vmatmul.mubr.bf16.gmra.mrb[0].mxu0 %v479
  %v1408 = vpop.f32.mrb[0].mxu0
  %v1409 = vadd.f32 %v886, %v1408
  %v1410 = vpop.f32.mrb[0].mxu0
  %v1411 = vadd.f32 %v888, %v1410
  %v1412 = vpop.f32.mrb[0].mxu0
  %v1413 = vadd.f32 %v890, %v1412
  %v1414 = vpop.f32.mrb[0].mxu0
  %v1415 = vadd.f32 %v892, %v1414
  %1416 = vdwg.mxu0
  %1417 = vmatprep.subr.bf16.mxu0 %v1215
  %1418 = vmatpush1.bf16.msra.mxu0 %v1214
  %1419 = vmatprep.subr.bf16.mxu0 %v1217
  %1420 = vmatpush1.bf16.msra.mxu0 %v1216
  %1421 = vmatprep.subr.bf16.mxu0 %v1219
  %1422 = vmatpush1.bf16.msra.mxu0 %v1218
  %1423 = vmatprep.subr.bf16.mxu0 %v1221
  %1424 = vmatpush1.bf16.msra.mxu0 %v1220
  %1425 = vmatprep.subr.bf16.mxu0 %v1223
  %1426 = vmatpush1.bf16.msra.mxu0 %v1222
  %1427 = vmatprep.subr.bf16.mxu0 %v1225
  %1428 = vmatpush1.bf16.msra.mxu0 %v1224
  %1429 = vmatprep.subr.bf16.mxu0 %v1227
  %1430 = vmatpush1.bf16.msra.mxu0 %v1226
  %1431 = vmatprep.subr.bf16.mxu0 %v1229
  %1432 = vmatpush1.bf16.msra.mxu0 %v1228
  %1433 = vmatprep.subr.bf16.mxu0 %v1231
  %1434 = vmatpush1.bf16.msra.mxu0 %v1230
  %1435 = vmatprep.subr.bf16.mxu0 %v1233
  %1436 = vmatpush1.bf16.msra.mxu0 %v1232
  %1437 = vmatprep.subr.bf16.mxu0 %v1235
  %1438 = vmatpush1.bf16.msra.mxu0 %v1234
  %1439 = vmatprep.subr.bf16.mxu0 %v1237
  %1440 = vmatpush1.bf16.msra.mxu0 %v1236
  %1441 = vmatprep.subr.bf16.mxu0 %v1239
  %1442 = vmatpush1.bf16.msra.mxu0 %v1238
  %1443 = vmatprep.subr.bf16.mxu0 %v1241
  %1444 = vmatpush1.bf16.msra.mxu0 %v1240
  %1445 = vmatprep.subr.bf16.mxu0 %v1243
  %1446 = vmatpush1.bf16.msra.mxu0 %v1242
  %1447 = vmatprep.subr.bf16.mxu0 %v1245
  %1448 = vmatpush1.bf16.msra.mxu0 %v1244
  %1449 = vmatprep.mubr.bf16.mxu0 %v482
  %1450 = vmatmul.mubr.bf16.gmra.mrb[0].mxu0 %v481
  %v1451 = vpop.f32.mrb[0].mxu0
  %v1452 = vadd.f32 %v1409, %v1451
  %v1453 = vpop.f32.mrb[0].mxu0
  %v1454 = vadd.f32 %v1411, %v1453
  %v1455 = vpop.f32.mrb[0].mxu0
  %v1456 = vadd.f32 %v1413, %v1455
  %v1457 = vpop.f32.mrb[0].mxu0
  %v1458 = vadd.f32 %v1415, %v1457
  %1459 = vdwg.mxu0
  %1460 = vmatprep.subr.bf16.mxu0 %v1247
  %1461 = vmatpush1.bf16.msra.mxu0 %v1246
  %1462 = vmatprep.subr.bf16.mxu0 %v1249
  %1463 = vmatpush1.bf16.msra.mxu0 %v1248
  %1464 = vmatprep.subr.bf16.mxu0 %v1251
  %1465 = vmatpush1.bf16.msra.mxu0 %v1250
  %1466 = vmatprep.subr.bf16.mxu0 %v1253
  %1467 = vmatpush1.bf16.msra.mxu0 %v1252
  %1468 = vmatprep.subr.bf16.mxu0 %v1255
  %1469 = vmatpush1.bf16.msra.mxu0 %v1254
  %1470 = vmatprep.subr.bf16.mxu0 %v1257
  %1471 = vmatpush1.bf16.msra.mxu0 %v1256
  %1472 = vmatprep.subr.bf16.mxu0 %v1259
  %1473 = vmatpush1.bf16.msra.mxu0 %v1258
  %1474 = vmatprep.subr.bf16.mxu0 %v1261
  %1475 = vmatpush1.bf16.msra.mxu0 %v1260
  %1476 = vmatprep.subr.bf16.mxu0 %v1263
  %1477 = vmatpush1.bf16.msra.mxu0 %v1262
  %1478 = vmatprep.subr.bf16.mxu0 %v1265
  %1479 = vmatpush1.bf16.msra.mxu0 %v1264
  %1480 = vmatprep.subr.bf16.mxu0 %v1267
  %1481 = vmatpush1.bf16.msra.mxu0 %v1266
  %1482 = vmatprep.subr.bf16.mxu0 %v1269
  %1483 = vmatpush1.bf16.msra.mxu0 %v1268
  %1484 = vmatprep.subr.bf16.mxu0 %v1271
  %1485 = vmatpush1.bf16.msra.mxu0 %v1270
  %1486 = vmatprep.subr.bf16.mxu0 %v1273
  %1487 = vmatpush1.bf16.msra.mxu0 %v1272
  %1488 = vmatprep.subr.bf16.mxu0 %v1275
  %1489 = vmatpush1.bf16.msra.mxu0 %v1274
  %1490 = vmatprep.subr.bf16.mxu0 %v1277
  %1491 = vmatpush1.bf16.msra.mxu0 %v1276
  %1492 = vmatprep.mubr.bf16.mxu0 %v484
  %1493 = vmatmul.mubr.bf16.gmra.mrb[0].mxu0 %v483
  %v1494 = vpop.f32.mrb[0].mxu0
  %v1495 = vadd.f32 %v1452, %v1494
  %v1496 = vpop.f32.mrb[0].mxu0
  %v1497 = vadd.f32 %v1454, %v1496
  %v1498 = vpop.f32.mrb[0].mxu0
  %v1499 = vadd.f32 %v1456, %v1498
  %v1500 = vpop.f32.mrb[0].mxu0
  %v1501 = vadd.f32 %v1458, %v1500
  %1502 = vdwg.mxu0
  %v1503 = vld [vmem:[%s6] sm:$0x3]
  %v1505 = vlaneseq
  %v1506 = vshrl.u32 %v1505, 7
  %v1507 = vsub.s32 0, %v1506
  %v1508 = vrot.slane %v1503, %v1507
  %v1509 = vlaneseq
  %v1510 = vshrl.u32 %v1509, 7
  %v1511 = vsub.s32 1, %v1510
  %v1512 = vrot.slane %v1503, %v1511
  %v1515 = vadd.f32 %v1495, %v1508
  %v1516 = vadd.f32 %v1497, %v1512
  %v1517 = vadd.f32 %v1499, %v1508
  %v1518 = vadd.f32 %v1501, %v1512
  %v1519 = vmul.f32 %v1515, 0.2
  %v1520 = vmul.f32 %v1516, 0.2
  %v1521 = vmul.f32 %v1517, 0.2
  %v1522 = vmul.f32 %v1518, 0.2
  %v1523 = vmax.f32 %v1515, %v1519
  %v1524 = vmax.f32 %v1516, %v1520
  %v1525 = vmax.f32 %v1517, %v1521
  %v1526 = vmax.f32 %v1518, %v1522
  %v1527 = vpack.c.bf16 %v1525, %v1523
  %v1528 = vpack.c.bf16 %v1526, %v1524
  %v1529 = vld [vmem:[%s4 + $0x420] sm:$0xff]
  %v1530 = vld [vmem:[%s4 + $0x428] sm:$0xff]
  %v1531 = vld [vmem:[%s4 + $0x430] sm:$0xff]
  %v1532 = vld [vmem:[%s4 + $0x438] sm:$0xff]
  %v1533 = vld [vmem:[%s4 + $0x440] sm:$0xff]
  %v1534 = vld [vmem:[%s4 + $0x448] sm:$0xff]
  %v1535 = vld [vmem:[%s4 + $0x450] sm:$0xff]
  %v1536 = vld [vmem:[%s4 + $0x458] sm:$0xff]
  %v1537 = vld [vmem:[%s4 + $0x460] sm:$0xff]
  %v1538 = vld [vmem:[%s4 + $0x468] sm:$0xff]
  %v1539 = vld [vmem:[%s4 + $0x470] sm:$0xff]
  %v1540 = vld [vmem:[%s4 + $0x478] sm:$0xff]
  %v1541 = vld [vmem:[%s4 + $0x480] sm:$0xff]
  %v1542 = vld [vmem:[%s4 + $0x488] sm:$0xff]
  %v1543 = vld [vmem:[%s4 + $0x490] sm:$0xff]
  %v1544 = vld [vmem:[%s4 + $0x498] sm:$0xff]
  %v1545 = vld [vmem:[%s4 + $0x4a0] sm:$0xff]
  %v1546 = vld [vmem:[%s4 + $0x4a8] sm:$0xff]
  %v1547 = vld [vmem:[%s4 + $0x4b0] sm:$0xff]
  %v1548 = vld [vmem:[%s4 + $0x4b8] sm:$0xff]
  %v1549 = vld [vmem:[%s4 + $0x4c0] sm:$0xff]
  %v1550 = vld [vmem:[%s4 + $0x4c8] sm:$0xff]
  %v1551 = vld [vmem:[%s4 + $0x4d0] sm:$0xff]
  %v1552 = vld [vmem:[%s4 + $0x4d8] sm:$0xff]
  %v1553 = vld [vmem:[%s4 + $0x4e0] sm:$0xff]
  %v1554 = vld [vmem:[%s4 + $0x4e8] sm:$0xff]
  %v1555 = vld [vmem:[%s4 + $0x4f0] sm:$0xff]
  %v1556 = vld [vmem:[%s4 + $0x4f8] sm:$0xff]
  %v1557 = vld [vmem:[%s4 + $0x500] sm:$0xff]
  %v1558 = vld [vmem:[%s4 + $0x508] sm:$0xff]
  %v1559 = vld [vmem:[%s4 + $0x510] sm:$0xff]
  %v1560 = vld [vmem:[%s4 + $0x518] sm:$0xff]
  %v1561 = vld [vmem:[%s6 + $0x2] sm:$0x3]
  %v1563 = vlaneseq
  %v1564 = vshrl.u32 %v1563, 7
  %v1565 = vsub.s32 0, %v1564
  %v1566 = vrot.slane %v1561, %v1565
  %v1567 = vlaneseq
  %v1568 = vshrl.u32 %v1567, 7
  %v1569 = vsub.s32 1, %v1568
  %v1570 = vrot.slane %v1561, %v1569
  %v1605 = vunpack.c.l.b16 %v1529
  %v1606 = vunpack.c.h.b16 %v1529
  %v1607 = vunpack.c.l.b16 %v1530
  %v1608 = vunpack.c.h.b16 %v1530
  %v1609 = vunpack.c.l.b16 %v1531
  %v1610 = vunpack.c.h.b16 %v1531
  %v1611 = vunpack.c.l.b16 %v1532
  %v1612 = vunpack.c.h.b16 %v1532
  %v1613 = vunpack.c.l.b16 %v1533
  %v1614 = vunpack.c.h.b16 %v1533
  %v1615 = vunpack.c.l.b16 %v1534
  %v1616 = vunpack.c.h.b16 %v1534
  %v1617 = vunpack.c.l.b16 %v1535
  %v1618 = vunpack.c.h.b16 %v1535
  %v1619 = vunpack.c.l.b16 %v1536
  %v1620 = vunpack.c.h.b16 %v1536
  %v1621 = vunpack.c.l.b16 %v1537
  %v1622 = vunpack.c.h.b16 %v1537
  %v1623 = vunpack.c.l.b16 %v1538
  %v1624 = vunpack.c.h.b16 %v1538
  %v1625 = vunpack.c.l.b16 %v1539
  %v1626 = vunpack.c.h.b16 %v1539
  %v1627 = vunpack.c.l.b16 %v1540
  %v1628 = vunpack.c.h.b16 %v1540
  %v1629 = vunpack.c.l.b16 %v1541
  %v1630 = vunpack.c.h.b16 %v1541
  %v1631 = vunpack.c.l.b16 %v1542
  %v1632 = vunpack.c.h.b16 %v1542
  %v1633 = vunpack.c.l.b16 %v1543
  %v1634 = vunpack.c.h.b16 %v1543
  %v1635 = vunpack.c.l.b16 %v1544
  %v1636 = vunpack.c.h.b16 %v1544
  %v1637 = vunpack.c.l.b16 %v1545
  %v1638 = vunpack.c.h.b16 %v1545
  %v1639 = vunpack.c.l.b16 %v1546
  %v1640 = vunpack.c.h.b16 %v1546
  %v1641 = vunpack.c.l.b16 %v1547
  %v1642 = vunpack.c.h.b16 %v1547
  %v1643 = vunpack.c.l.b16 %v1548
  %v1644 = vunpack.c.h.b16 %v1548
  %v1645 = vunpack.c.l.b16 %v1549
  %v1646 = vunpack.c.h.b16 %v1549
  %v1647 = vunpack.c.l.b16 %v1550
  %v1648 = vunpack.c.h.b16 %v1550
  %v1649 = vunpack.c.l.b16 %v1551
  %v1650 = vunpack.c.h.b16 %v1551
  %v1651 = vunpack.c.l.b16 %v1552
  %v1652 = vunpack.c.h.b16 %v1552
  %v1653 = vunpack.c.l.b16 %v1553
  %v1654 = vunpack.c.h.b16 %v1553
  %v1655 = vunpack.c.l.b16 %v1554
  %v1656 = vunpack.c.h.b16 %v1554
  %v1657 = vunpack.c.l.b16 %v1555
  %v1658 = vunpack.c.h.b16 %v1555
  %v1659 = vunpack.c.l.b16 %v1556
  %v1660 = vunpack.c.h.b16 %v1556
  %v1661 = vunpack.c.l.b16 %v1557
  %v1662 = vunpack.c.h.b16 %v1557
  %v1663 = vunpack.c.l.b16 %v1558
  %v1664 = vunpack.c.h.b16 %v1558
  %v1665 = vunpack.c.l.b16 %v1559
  %v1666 = vunpack.c.h.b16 %v1559
  %v1667 = vunpack.c.l.b16 %v1560
  %v1668 = vunpack.c.h.b16 %v1560
  %v1669 = vpack.c.b16 %v1607, %v1605
  %v1670 = vpack.c.b16 %v1608, %v1606
  %v1671 = vpack.c.b16 %v1611, %v1609
  %v1672 = vpack.c.b16 %v1612, %v1610
  %v1673 = vpack.c.b16 %v1615, %v1613
  %v1674 = vpack.c.b16 %v1616, %v1614
  %v1675 = vpack.c.b16 %v1619, %v1617
  %v1676 = vpack.c.b16 %v1620, %v1618
  %v1677 = vpack.c.b16 %v1623, %v1621
  %v1678 = vpack.c.b16 %v1624, %v1622
  %v1679 = vpack.c.b16 %v1627, %v1625
  %v1680 = vpack.c.b16 %v1628, %v1626
  %v1681 = vpack.c.b16 %v1631, %v1629
  %v1682 = vpack.c.b16 %v1632, %v1630
  %v1683 = vpack.c.b16 %v1635, %v1633
  %v1684 = vpack.c.b16 %v1636, %v1634
  %v1685 = vpack.c.b16 %v1639, %v1637
  %v1686 = vpack.c.b16 %v1640, %v1638
  %v1687 = vpack.c.b16 %v1643, %v1641
  %v1688 = vpack.c.b16 %v1644, %v1642
  %v1689 = vpack.c.b16 %v1647, %v1645
  %v1690 = vpack.c.b16 %v1648, %v1646
  %v1691 = vpack.c.b16 %v1651, %v1649
  %v1692 = vpack.c.b16 %v1652, %v1650
  %v1693 = vpack.c.b16 %v1655, %v1653
  %v1694 = vpack.c.b16 %v1656, %v1654
  %v1695 = vpack.c.b16 %v1659, %v1657
  %v1696 = vpack.c.b16 %v1660, %v1658
  %v1697 = vpack.c.b16 %v1663, %v1661
  %v1698 = vpack.c.b16 %v1664, %v1662
  %v1699 = vpack.c.b16 %v1667, %v1665
  %v1700 = vpack.c.b16 %v1668, %v1666
  %1733 = vmatprep.subr.bf16.mxu0 %v1670
  %1734 = vmatpush1.bf16.msra.mxu0 %v1669
  %1735 = vmatprep.subr.bf16.mxu0 %v1672
  %1736 = vmatpush1.bf16.msra.mxu0 %v1671
  %1737 = vmatprep.subr.bf16.mxu0 %v1674
  %1738 = vmatpush1.bf16.msra.mxu0 %v1673
  %1739 = vmatprep.subr.bf16.mxu0 %v1676
  %1740 = vmatpush1.bf16.msra.mxu0 %v1675
  %1741 = vmatprep.subr.bf16.mxu0 %v1678
  %1742 = vmatpush1.bf16.msra.mxu0 %v1677
  %1743 = vmatprep.subr.bf16.mxu0 %v1680
  %1744 = vmatpush1.bf16.msra.mxu0 %v1679
  %1745 = vmatprep.subr.bf16.mxu0 %v1682
  %1746 = vmatpush1.bf16.msra.mxu0 %v1681
  %1747 = vmatprep.subr.bf16.mxu0 %v1684
  %1748 = vmatpush1.bf16.msra.mxu0 %v1683
  %1749 = vmatprep.subr.bf16.mxu0 %v1686
  %1750 = vmatpush1.bf16.msra.mxu0 %v1685
  %1751 = vmatprep.subr.bf16.mxu0 %v1688
  %1752 = vmatpush1.bf16.msra.mxu0 %v1687
  %1753 = vmatprep.subr.bf16.mxu0 %v1690
  %1754 = vmatpush1.bf16.msra.mxu0 %v1689
  %1755 = vmatprep.subr.bf16.mxu0 %v1692
  %1756 = vmatpush1.bf16.msra.mxu0 %v1691
  %1757 = vmatprep.subr.bf16.mxu0 %v1694
  %1758 = vmatpush1.bf16.msra.mxu0 %v1693
  %1759 = vmatprep.subr.bf16.mxu0 %v1696
  %1760 = vmatpush1.bf16.msra.mxu0 %v1695
  %1761 = vmatprep.subr.bf16.mxu0 %v1698
  %1762 = vmatpush1.bf16.msra.mxu0 %v1697
  %1763 = vmatprep.subr.bf16.mxu0 %v1700
  %1764 = vmatpush1.bf16.msra.mxu0 %v1699
  %1765 = vmatprep.mubr.bf16.mxu0 %v1528
  %1766 = vmatmul.mubr.bf16.gmra.mrb[0].mxu0 %v1527
  %v1767 = vpop.f32.mrb[0].mxu0
  %v1768 = vadd.f32 %v1566, %v1767
  %v1769 = vpop.f32.mrb[0].mxu0
  %v1770 = vadd.f32 %v1570, %v1769
  %v1771 = vpop.f32.mrb[0].mxu0
  %v1772 = vadd.f32 %v1566, %v1771
  %v1773 = vpop.f32.mrb[0].mxu0
  %v1774 = vadd.f32 %v1570, %v1773
  %1775 = vdwg.mxu0
  %v1776 = vmul.f32 %v1768, 0.2
  %v1777 = vmul.f32 %v1770, 0.2
  %v1778 = vmul.f32 %v1772, 0.2
  %v1779 = vmul.f32 %v1774, 0.2
  %v1780 = vmax.f32 %v1768, %v1776
  %v1781 = vmax.f32 %v1770, %v1777
  %v1782 = vmax.f32 %v1772, %v1778
  %v1783 = vmax.f32 %v1774, %v1779
  %v1784 = vadd.f32 %v1780, %v1523
  %v1785 = vadd.f32 %v1781, %v1524
  %v1786 = vadd.f32 %v1782, %v1525
  %v1787 = vadd.f32 %v1783, %v1526
  %v1788 = vpack.c.bf16 %v1786, %v1784
  %v1789 = vpack.c.bf16 %v1787, %v1785
  %v1790 = vld [vmem:[%s5] sm:$0xff]
  %v1791 = vld [vmem:[%s5 + $0x8] sm:$0xff]
  %v1792 = vld [vmem:[%s5 + $0x10] sm:$0xff]
  %v1793 = vld [vmem:[%s5 + $0x18] sm:$0xff]
  %v1794 = vld [vmem:[%s5 + $0x20] sm:$0xff]
  %v1795 = vld [vmem:[%s5 + $0x28] sm:$0xff]
  %v1796 = vld [vmem:[%s5 + $0x30] sm:$0xff]
  %v1797 = vld [vmem:[%s5 + $0x38] sm:$0xff]
  %v1798 = vld [vmem:[%s5 + $0x40] sm:$0xff]
  %v1799 = vld [vmem:[%s5 + $0x48] sm:$0xff]
  %v1800 = vld [vmem:[%s5 + $0x50] sm:$0xff]
  %v1801 = vld [vmem:[%s5 + $0x58] sm:$0xff]
  %v1802 = vld [vmem:[%s5 + $0x60] sm:$0xff]
  %v1803 = vld [vmem:[%s5 + $0x68] sm:$0xff]
  %v1804 = vld [vmem:[%s5 + $0x70] sm:$0xff]
  %v1805 = vld [vmem:[%s5 + $0x78] sm:$0xff]
  %v1806 = vld [vmem:[%s5 + $0x80] sm:$0xff]
  %v1807 = vld [vmem:[%s5 + $0x88] sm:$0xff]
  %v1808 = vld [vmem:[%s5 + $0x90] sm:$0xff]
  %v1809 = vld [vmem:[%s5 + $0x98] sm:$0xff]
  %v1810 = vld [vmem:[%s5 + $0xa0] sm:$0xff]
  %v1811 = vld [vmem:[%s5 + $0xa8] sm:$0xff]
  %v1812 = vld [vmem:[%s5 + $0xb0] sm:$0xff]
  %v1813 = vld [vmem:[%s5 + $0xb8] sm:$0xff]
  %v1814 = vld [vmem:[%s5 + $0xc0] sm:$0xff]
  %v1815 = vld [vmem:[%s5 + $0xc8] sm:$0xff]
  %v1816 = vld [vmem:[%s5 + $0xd0] sm:$0xff]
  %v1817 = vld [vmem:[%s5 + $0xd8] sm:$0xff]
  %v1818 = vld [vmem:[%s5 + $0xe0] sm:$0xff]
  %v1819 = vld [vmem:[%s5 + $0xe8] sm:$0xff]
  %v1820 = vld [vmem:[%s5 + $0xf0] sm:$0xff]
  %v1821 = vld [vmem:[%s5 + $0xf8] sm:$0xff]
  %v1822 = vld [vmem:[%s5 + $0x100] sm:$0xff]
  %v1823 = vld [vmem:[%s5 + $0x108] sm:$0xff]
  %v1824 = vld [vmem:[%s5 + $0x110] sm:$0xff]
  %v1825 = vld [vmem:[%s5 + $0x118] sm:$0xff]
  %v1826 = vld [vmem:[%s5 + $0x120] sm:$0xff]
  %v1827 = vld [vmem:[%s5 + $0x128] sm:$0xff]
  %v1828 = vld [vmem:[%s5 + $0x130] sm:$0xff]
  %v1829 = vld [vmem:[%s5 + $0x138] sm:$0xff]
  %v1830 = vld [vmem:[%s5 + $0x140] sm:$0xff]
  %v1831 = vld [vmem:[%s5 + $0x148] sm:$0xff]
  %v1832 = vld [vmem:[%s5 + $0x150] sm:$0xff]
  %v1833 = vld [vmem:[%s5 + $0x158] sm:$0xff]
  %v1834 = vld [vmem:[%s5 + $0x160] sm:$0xff]
  %v1835 = vld [vmem:[%s5 + $0x168] sm:$0xff]
  %v1836 = vld [vmem:[%s5 + $0x170] sm:$0xff]
  %v1837 = vld [vmem:[%s5 + $0x178] sm:$0xff]
  %v1838 = vld [vmem:[%s5 + $0x180] sm:$0xff]
  %v1839 = vld [vmem:[%s5 + $0x188] sm:$0xff]
  %v1840 = vld [vmem:[%s5 + $0x190] sm:$0xff]
  %v1841 = vld [vmem:[%s5 + $0x198] sm:$0xff]
  %v1842 = vld [vmem:[%s5 + $0x1a0] sm:$0xff]
  %v1843 = vld [vmem:[%s5 + $0x1a8] sm:$0xff]
  %v1844 = vld [vmem:[%s5 + $0x1b0] sm:$0xff]
  %v1845 = vld [vmem:[%s5 + $0x1b8] sm:$0xff]
  %v1846 = vld [vmem:[%s5 + $0x1c0] sm:$0xff]
  %v1847 = vld [vmem:[%s5 + $0x1c8] sm:$0xff]
  %v1848 = vld [vmem:[%s5 + $0x1d0] sm:$0xff]
  %v1849 = vld [vmem:[%s5 + $0x1d8] sm:$0xff]
  %v1850 = vld [vmem:[%s5 + $0x1e0] sm:$0xff]
  %v1851 = vld [vmem:[%s5 + $0x1e8] sm:$0xff]
  %v1852 = vld [vmem:[%s5 + $0x1f0] sm:$0xff]
  %v1853 = vld [vmem:[%s5 + $0x1f8] sm:$0xff]
  %v1854 = vld [vmem:[%s5 + $0x200] sm:$0xff]
  %v1855 = vld [vmem:[%s5 + $0x208] sm:$0xff]
  %v1856 = vld [vmem:[%s5 + $0x210] sm:$0xff]
  %v1857 = vld [vmem:[%s5 + $0x218] sm:$0xff]
  %v1858 = vld [vmem:[%s5 + $0x220] sm:$0xff]
  %v1859 = vld [vmem:[%s5 + $0x228] sm:$0xff]
  %v1860 = vld [vmem:[%s5 + $0x230] sm:$0xff]
  %v1861 = vld [vmem:[%s5 + $0x238] sm:$0xff]
  %v1862 = vld [vmem:[%s5 + $0x240] sm:$0xff]
  %v1863 = vld [vmem:[%s5 + $0x248] sm:$0xff]
  %v1864 = vld [vmem:[%s5 + $0x250] sm:$0xff]
  %v1865 = vld [vmem:[%s5 + $0x258] sm:$0xff]
  %v1866 = vld [vmem:[%s5 + $0x260] sm:$0xff]
  %v1867 = vld [vmem:[%s5 + $0x268] sm:$0xff]
  %v1868 = vld [vmem:[%s5 + $0x270] sm:$0xff]
  %v1869 = vld [vmem:[%s5 + $0x278] sm:$0xff]
  %v1870 = vld [vmem:[%s5 + $0x280] sm:$0xff]
  %v1871 = vld [vmem:[%s5 + $0x288] sm:$0xff]
  %v1872 = vld [vmem:[%s5 + $0x290] sm:$0xff]
  %v1873 = vld [vmem:[%s5 + $0x298] sm:$0xff]
  %v1874 = vld [vmem:[%s5 + $0x2a0] sm:$0xff]
  %v1875 = vld [vmem:[%s5 + $0x2a8] sm:$0xff]
  %v1876 = vld [vmem:[%s5 + $0x2b0] sm:$0xff]
  %v1877 = vld [vmem:[%s5 + $0x2b8] sm:$0xff]
  %v1878 = vld [vmem:[%s5 + $0x2c0] sm:$0xff]
  %v1879 = vld [vmem:[%s5 + $0x2c8] sm:$0xff]
  %v1880 = vld [vmem:[%s5 + $0x2d0] sm:$0xff]
  %v1881 = vld [vmem:[%s5 + $0x2d8] sm:$0xff]
  %v1882 = vld [vmem:[%s5 + $0x2e0] sm:$0xff]
  %v1883 = vld [vmem:[%s5 + $0x2e8] sm:$0xff]
  %v1884 = vld [vmem:[%s5 + $0x2f0] sm:$0xff]
  %v1885 = vld [vmem:[%s5 + $0x2f8] sm:$0xff]
  %v1886 = vld [vmem:[%s5 + $0x300] sm:$0xff]
  %v1887 = vld [vmem:[%s5 + $0x308] sm:$0xff]
  %v1888 = vld [vmem:[%s5 + $0x310] sm:$0xff]
  %v1889 = vld [vmem:[%s5 + $0x318] sm:$0xff]
  %v1890 = vld [vmem:[%s5 + $0x320] sm:$0xff]
  %v1891 = vld [vmem:[%s5 + $0x328] sm:$0xff]
  %v1892 = vld [vmem:[%s5 + $0x330] sm:$0xff]
  %v1893 = vld [vmem:[%s5 + $0x338] sm:$0xff]
  %v1894 = vld [vmem:[%s5 + $0x340] sm:$0xff]
  %v1895 = vld [vmem:[%s5 + $0x348] sm:$0xff]
  %v1896 = vld [vmem:[%s5 + $0x350] sm:$0xff]
  %v1897 = vld [vmem:[%s5 + $0x358] sm:$0xff]
  %v1898 = vld [vmem:[%s5 + $0x360] sm:$0xff]
  %v1899 = vld [vmem:[%s5 + $0x368] sm:$0xff]
  %v1900 = vld [vmem:[%s5 + $0x370] sm:$0xff]
  %v1901 = vld [vmem:[%s5 + $0x378] sm:$0xff]
  %v1902 = vld [vmem:[%s5 + $0x380] sm:$0xff]
  %v1903 = vld [vmem:[%s5 + $0x388] sm:$0xff]
  %v1904 = vld [vmem:[%s5 + $0x390] sm:$0xff]
  %v1905 = vld [vmem:[%s5 + $0x398] sm:$0xff]
  %v1906 = vld [vmem:[%s5 + $0x3a0] sm:$0xff]
  %v1907 = vld [vmem:[%s5 + $0x3a8] sm:$0xff]
  %v1908 = vld [vmem:[%s5 + $0x3b0] sm:$0xff]
  %v1909 = vld [vmem:[%s5 + $0x3b8] sm:$0xff]
  %v1910 = vld [vmem:[%s5 + $0x3c0] sm:$0xff]
  %v1911 = vld [vmem:[%s5 + $0x3c8] sm:$0xff]
  %v1912 = vld [vmem:[%s5 + $0x3d0] sm:$0xff]
  %v1913 = vld [vmem:[%s5 + $0x3d8] sm:$0xff]
  %v1914 = vld [vmem:[%s5 + $0x3e0] sm:$0xff]
  %v1915 = vld [vmem:[%s5 + $0x3e8] sm:$0xff]
  %v1916 = vld [vmem:[%s5 + $0x3f0] sm:$0xff]
  %v1917 = vld [vmem:[%s5 + $0x3f8] sm:$0xff]
  %v1918 = vld [vmem:[%s6 + $0x4] sm:$0xff]
  %v1920 = vlaneseq
  %v1921 = vshrl.u32 %v1920, 7
  %v1922 = vsub.s32 0, %v1921
  %v1923 = vrot.slane %v1918, %v1922
  %v1924 = vlaneseq
  %v1925 = vshrl.u32 %v1924, 7
  %v1926 = vsub.s32 1, %v1925
  %v1927 = vrot.slane %v1918, %v1926
  %v1928 = vlaneseq
  %v1929 = vshrl.u32 %v1928, 7
  %v1930 = vsub.s32 2, %v1929
  %v1931 = vrot.slane %v1918, %v1930
  %v1932 = vlaneseq
  %v1933 = vshrl.u32 %v1932, 7
  %v1934 = vsub.s32 3, %v1933
  %v1935 = vrot.slane %v1918, %v1934
  %v1936 = vlaneseq
  %v1937 = vshrl.u32 %v1936, 7
  %v1938 = vsub.s32 4, %v1937
  %v1939 = vrot.slane %v1918, %v1938
  %v1940 = vlaneseq
  %v1941 = vshrl.u32 %v1940, 7
  %v1942 = vsub.s32 5, %v1941
  %v1943 = vrot.slane %v1918, %v1942
  %v1944 = vlaneseq
  %v1945 = vshrl.u32 %v1944, 7
  %v1946 = vsub.s32 6, %v1945
  %v1947 = vrot.slane %v1918, %v1946
  %v1948 = vlaneseq
  %v1949 = vshrl.u32 %v1948, 7
  %v1950 = vsub.s32 7, %v1949
  %v1951 = vrot.slane %v1918, %v1950
  %v2088 = vunpack.c.l.b16 %v1790
  %v2089 = vunpack.c.h.b16 %v1790
  %v2090 = vunpack.c.l.b16 %v1791
  %v2091 = vunpack.c.h.b16 %v1791
  %v2092 = vunpack.c.l.b16 %v1792
  %v2093 = vunpack.c.h.b16 %v1792
  %v2094 = vunpack.c.l.b16 %v1793
  %v2095 = vunpack.c.h.b16 %v1793
  %v2096 = vunpack.c.l.b16 %v1794
  %v2097 = vunpack.c.h.b16 %v1794
  %v2098 = vunpack.c.l.b16 %v1795
  %v2099 = vunpack.c.h.b16 %v1795
  %v2100 = vunpack.c.l.b16 %v1796
  %v2101 = vunpack.c.h.b16 %v1796
  %v2102 = vunpack.c.l.b16 %v1797
  %v2103 = vunpack.c.h.b16 %v1797
  %v2104 = vunpack.c.l.b16 %v1798
  %v2105 = vunpack.c.h.b16 %v1798
  %v2106 = vunpack.c.l.b16 %v1799
  %v2107 = vunpack.c.h.b16 %v1799
  %v2108 = vunpack.c.l.b16 %v1800
  %v2109 = vunpack.c.h.b16 %v1800
  %v2110 = vunpack.c.l.b16 %v1801
  %v2111 = vunpack.c.h.b16 %v1801
  %v2112 = vunpack.c.l.b16 %v1802
  %v2113 = vunpack.c.h.b16 %v1802
  %v2114 = vunpack.c.l.b16 %v1803
  %v2115 = vunpack.c.h.b16 %v1803
  %v2116 = vunpack.c.l.b16 %v1804
  %v2117 = vunpack.c.h.b16 %v1804
  %v2118 = vunpack.c.l.b16 %v1805
  %v2119 = vunpack.c.h.b16 %v1805
  %v2120 = vunpack.c.l.b16 %v1806
  %v2121 = vunpack.c.h.b16 %v1806
  %v2122 = vunpack.c.l.b16 %v1807
  %v2123 = vunpack.c.h.b16 %v1807
  %v2124 = vunpack.c.l.b16 %v1808
  %v2125 = vunpack.c.h.b16 %v1808
  %v2126 = vunpack.c.l.b16 %v1809
  %v2127 = vunpack.c.h.b16 %v1809
  %v2128 = vunpack.c.l.b16 %v1810
  %v2129 = vunpack.c.h.b16 %v1810
  %v2130 = vunpack.c.l.b16 %v1811
  %v2131 = vunpack.c.h.b16 %v1811
  %v2132 = vunpack.c.l.b16 %v1812
  %v2133 = vunpack.c.h.b16 %v1812
  %v2134 = vunpack.c.l.b16 %v1813
  %v2135 = vunpack.c.h.b16 %v1813
  %v2136 = vunpack.c.l.b16 %v1814
  %v2137 = vunpack.c.h.b16 %v1814
  %v2138 = vunpack.c.l.b16 %v1815
  %v2139 = vunpack.c.h.b16 %v1815
  %v2140 = vunpack.c.l.b16 %v1816
  %v2141 = vunpack.c.h.b16 %v1816
  %v2142 = vunpack.c.l.b16 %v1817
  %v2143 = vunpack.c.h.b16 %v1817
  %v2144 = vunpack.c.l.b16 %v1818
  %v2145 = vunpack.c.h.b16 %v1818
  %v2146 = vunpack.c.l.b16 %v1819
  %v2147 = vunpack.c.h.b16 %v1819
  %v2148 = vunpack.c.l.b16 %v1820
  %v2149 = vunpack.c.h.b16 %v1820
  %v2150 = vunpack.c.l.b16 %v1821
  %v2151 = vunpack.c.h.b16 %v1821
  %v2152 = vunpack.c.l.b16 %v1822
  %v2153 = vunpack.c.h.b16 %v1822
  %v2154 = vunpack.c.l.b16 %v1823
  %v2155 = vunpack.c.h.b16 %v1823
  %v2156 = vunpack.c.l.b16 %v1824
  %v2157 = vunpack.c.h.b16 %v1824
  %v2158 = vunpack.c.l.b16 %v1825
  %v2159 = vunpack.c.h.b16 %v1825
  %v2160 = vunpack.c.l.b16 %v1826
  %v2161 = vunpack.c.h.b16 %v1826
  %v2162 = vunpack.c.l.b16 %v1827
  %v2163 = vunpack.c.h.b16 %v1827
  %v2164 = vunpack.c.l.b16 %v1828
  %v2165 = vunpack.c.h.b16 %v1828
  %v2166 = vunpack.c.l.b16 %v1829
  %v2167 = vunpack.c.h.b16 %v1829
  %v2168 = vunpack.c.l.b16 %v1830
  %v2169 = vunpack.c.h.b16 %v1830
  %v2170 = vunpack.c.l.b16 %v1831
  %v2171 = vunpack.c.h.b16 %v1831
  %v2172 = vunpack.c.l.b16 %v1832
  %v2173 = vunpack.c.h.b16 %v1832
  %v2174 = vunpack.c.l.b16 %v1833
  %v2175 = vunpack.c.h.b16 %v1833
  %v2176 = vunpack.c.l.b16 %v1834
  %v2177 = vunpack.c.h.b16 %v1834
  %v2178 = vunpack.c.l.b16 %v1835
  %v2179 = vunpack.c.h.b16 %v1835
  %v2180 = vunpack.c.l.b16 %v1836
  %v2181 = vunpack.c.h.b16 %v1836
  %v2182 = vunpack.c.l.b16 %v1837
  %v2183 = vunpack.c.h.b16 %v1837
  %v2184 = vunpack.c.l.b16 %v1838
  %v2185 = vunpack.c.h.b16 %v1838
  %v2186 = vunpack.c.l.b16 %v1839
  %v2187 = vunpack.c.h.b16 %v1839
  %v2188 = vunpack.c.l.b16 %v1840
  %v2189 = vunpack.c.h.b16 %v1840
  %v2190 = vunpack.c.l.b16 %v1841
  %v2191 = vunpack.c.h.b16 %v1841
  %v2192 = vunpack.c.l.b16 %v1842
  %v2193 = vunpack.c.h.b16 %v1842
  %v2194 = vunpack.c.l.b16 %v1843
  %v2195 = vunpack.c.h.b16 %v1843
  %v2196 = vunpack.c.l.b16 %v1844
  %v2197 = vunpack.c.h.b16 %v1844
  %v2198 = vunpack.c.l.b16 %v1845
  %v2199 = vunpack.c.h.b16 %v1845
  %v2200 = vunpack.c.l.b16 %v1846
  %v2201 = vunpack.c.h.b16 %v1846
  %v2202 = vunpack.c.l.b16 %v1847
  %v2203 = vunpack.c.h.b16 %v1847
  %v2204 = vunpack.c.l.b16 %v1848
  %v2205 = vunpack.c.h.b16 %v1848
  %v2206 = vunpack.c.l.b16 %v1849
  %v2207 = vunpack.c.h.b16 %v1849
  %v2208 = vunpack.c.l.b16 %v1850
  %v2209 = vunpack.c.h.b16 %v1850
  %v2210 = vunpack.c.l.b16 %v1851
  %v2211 = vunpack.c.h.b16 %v1851
  %v2212 = vunpack.c.l.b16 %v1852
  %v2213 = vunpack.c.h.b16 %v1852
  %v2214 = vunpack.c.l.b16 %v1853
  %v2215 = vunpack.c.h.b16 %v1853
  %v2216 = vunpack.c.l.b16 %v1854
  %v2217 = vunpack.c.h.b16 %v1854
  %v2218 = vunpack.c.l.b16 %v1855
  %v2219 = vunpack.c.h.b16 %v1855
  %v2220 = vunpack.c.l.b16 %v1856
  %v2221 = vunpack.c.h.b16 %v1856
  %v2222 = vunpack.c.l.b16 %v1857
  %v2223 = vunpack.c.h.b16 %v1857
  %v2224 = vunpack.c.l.b16 %v1858
  %v2225 = vunpack.c.h.b16 %v1858
  %v2226 = vunpack.c.l.b16 %v1859
  %v2227 = vunpack.c.h.b16 %v1859
  %v2228 = vunpack.c.l.b16 %v1860
  %v2229 = vunpack.c.h.b16 %v1860
  %v2230 = vunpack.c.l.b16 %v1861
  %v2231 = vunpack.c.h.b16 %v1861
  %v2232 = vunpack.c.l.b16 %v1862
  %v2233 = vunpack.c.h.b16 %v1862
  %v2234 = vunpack.c.l.b16 %v1863
  %v2235 = vunpack.c.h.b16 %v1863
  %v2236 = vunpack.c.l.b16 %v1864
  %v2237 = vunpack.c.h.b16 %v1864
  %v2238 = vunpack.c.l.b16 %v1865
  %v2239 = vunpack.c.h.b16 %v1865
  %v2240 = vunpack.c.l.b16 %v1866
  %v2241 = vunpack.c.h.b16 %v1866
  %v2242 = vunpack.c.l.b16 %v1867
  %v2243 = vunpack.c.h.b16 %v1867
  %v2244 = vunpack.c.l.b16 %v1868
  %v2245 = vunpack.c.h.b16 %v1868
  %v2246 = vunpack.c.l.b16 %v1869
  %v2247 = vunpack.c.h.b16 %v1869
  %v2248 = vunpack.c.l.b16 %v1870
  %v2249 = vunpack.c.h.b16 %v1870
  %v2250 = vunpack.c.l.b16 %v1871
  %v2251 = vunpack.c.h.b16 %v1871
  %v2252 = vunpack.c.l.b16 %v1872
  %v2253 = vunpack.c.h.b16 %v1872
  %v2254 = vunpack.c.l.b16 %v1873
  %v2255 = vunpack.c.h.b16 %v1873
  %v2256 = vunpack.c.l.b16 %v1874
  %v2257 = vunpack.c.h.b16 %v1874
  %v2258 = vunpack.c.l.b16 %v1875
  %v2259 = vunpack.c.h.b16 %v1875
  %v2260 = vunpack.c.l.b16 %v1876
  %v2261 = vunpack.c.h.b16 %v1876
  %v2262 = vunpack.c.l.b16 %v1877
  %v2263 = vunpack.c.h.b16 %v1877
  %v2264 = vunpack.c.l.b16 %v1878
  %v2265 = vunpack.c.h.b16 %v1878
  %v2266 = vunpack.c.l.b16 %v1879
  %v2267 = vunpack.c.h.b16 %v1879
  %v2268 = vunpack.c.l.b16 %v1880
  %v2269 = vunpack.c.h.b16 %v1880
  %v2270 = vunpack.c.l.b16 %v1881
  %v2271 = vunpack.c.h.b16 %v1881
  %v2272 = vunpack.c.l.b16 %v1882
  %v2273 = vunpack.c.h.b16 %v1882
  %v2274 = vunpack.c.l.b16 %v1883
  %v2275 = vunpack.c.h.b16 %v1883
  %v2276 = vunpack.c.l.b16 %v1884
  %v2277 = vunpack.c.h.b16 %v1884
  %v2278 = vunpack.c.l.b16 %v1885
  %v2279 = vunpack.c.h.b16 %v1885
  %v2280 = vunpack.c.l.b16 %v1886
  %v2281 = vunpack.c.h.b16 %v1886
  %v2282 = vunpack.c.l.b16 %v1887
  %v2283 = vunpack.c.h.b16 %v1887
  %v2284 = vunpack.c.l.b16 %v1888
  %v2285 = vunpack.c.h.b16 %v1888
  %v2286 = vunpack.c.l.b16 %v1889
  %v2287 = vunpack.c.h.b16 %v1889
  %v2288 = vunpack.c.l.b16 %v1890
  %v2289 = vunpack.c.h.b16 %v1890
  %v2290 = vunpack.c.l.b16 %v1891
  %v2291 = vunpack.c.h.b16 %v1891
  %v2292 = vunpack.c.l.b16 %v1892
  %v2293 = vunpack.c.h.b16 %v1892
  %v2294 = vunpack.c.l.b16 %v1893
  %v2295 = vunpack.c.h.b16 %v1893
  %v2296 = vunpack.c.l.b16 %v1894
  %v2297 = vunpack.c.h.b16 %v1894
  %v2298 = vunpack.c.l.b16 %v1895
  %v2299 = vunpack.c.h.b16 %v1895
  %v2300 = vunpack.c.l.b16 %v1896
  %v2301 = vunpack.c.h.b16 %v1896
  %v2302 = vunpack.c.l.b16 %v1897
  %v2303 = vunpack.c.h.b16 %v1897
  %v2304 = vunpack.c.l.b16 %v1898
  %v2305 = vunpack.c.h.b16 %v1898
  %v2306 = vunpack.c.l.b16 %v1899
  %v2307 = vunpack.c.h.b16 %v1899
  %v2308 = vunpack.c.l.b16 %v1900
  %v2309 = vunpack.c.h.b16 %v1900
  %v2310 = vunpack.c.l.b16 %v1901
  %v2311 = vunpack.c.h.b16 %v1901
  %v2312 = vunpack.c.l.b16 %v1902
  %v2313 = vunpack.c.h.b16 %v1902
  %v2314 = vunpack.c.l.b16 %v1903
  %v2315 = vunpack.c.h.b16 %v1903
  %v2316 = vunpack.c.l.b16 %v1904
  %v2317 = vunpack.c.h.b16 %v1904
  %v2318 = vunpack.c.l.b16 %v1905
  %v2319 = vunpack.c.h.b16 %v1905
  %v2320 = vunpack.c.l.b16 %v1906
  %v2321 = vunpack.c.h.b16 %v1906
  %v2322 = vunpack.c.l.b16 %v1907
  %v2323 = vunpack.c.h.b16 %v1907
  %v2324 = vunpack.c.l.b16 %v1908
  %v2325 = vunpack.c.h.b16 %v1908
  %v2326 = vunpack.c.l.b16 %v1909
  %v2327 = vunpack.c.h.b16 %v1909
  %v2328 = vunpack.c.l.b16 %v1910
  %v2329 = vunpack.c.h.b16 %v1910
  %v2330 = vunpack.c.l.b16 %v1911
  %v2331 = vunpack.c.h.b16 %v1911
  %v2332 = vunpack.c.l.b16 %v1912
  %v2333 = vunpack.c.h.b16 %v1912
  %v2334 = vunpack.c.l.b16 %v1913
  %v2335 = vunpack.c.h.b16 %v1913
  %v2336 = vunpack.c.l.b16 %v1914
  %v2337 = vunpack.c.h.b16 %v1914
  %v2338 = vunpack.c.l.b16 %v1915
  %v2339 = vunpack.c.h.b16 %v1915
  %v2340 = vunpack.c.l.b16 %v1916
  %v2341 = vunpack.c.h.b16 %v1916
  %v2342 = vunpack.c.l.b16 %v1917
  %v2343 = vunpack.c.h.b16 %v1917
  %v2344 = vpack.c.b16 %v2096, %v2088
  %v2345 = vpack.c.b16 %v2097, %v2089
  %v2346 = vpack.c.b16 %v2098, %v2090
  %v2347 = vpack.c.b16 %v2099, %v2091
  %v2348 = vpack.c.b16 %v2100, %v2092
  %v2349 = vpack.c.b16 %v2101, %v2093
  %v2350 = vpack.c.b16 %v2102, %v2094
  %v2351 = vpack.c.b16 %v2103, %v2095
  %v2352 = vpack.c.b16 %v2112, %v2104
  %v2353 = vpack.c.b16 %v2113, %v2105
  %v2354 = vpack.c.b16 %v2114, %v2106
  %v2355 = vpack.c.b16 %v2115, %v2107
  %v2356 = vpack.c.b16 %v2116, %v2108
  %v2357 = vpack.c.b16 %v2117, %v2109
  %v2358 = vpack.c.b16 %v2118, %v2110
  %v2359 = vpack.c.b16 %v2119, %v2111
  %v2360 = vpack.c.b16 %v2128, %v2120
  %v2361 = vpack.c.b16 %v2129, %v2121
  %v2362 = vpack.c.b16 %v2130, %v2122
  %v2363 = vpack.c.b16 %v2131, %v2123
  %v2364 = vpack.c.b16 %v2132, %v2124
  %v2365 = vpack.c.b16 %v2133, %v2125
  %v2366 = vpack.c.b16 %v2134, %v2126
  %v2367 = vpack.c.b16 %v2135, %v2127
  %v2368 = vpack.c.b16 %v2144, %v2136
  %v2369 = vpack.c.b16 %v2145, %v2137
  %v2370 = vpack.c.b16 %v2146, %v2138
  %v2371 = vpack.c.b16 %v2147, %v2139
  %v2372 = vpack.c.b16 %v2148, %v2140
  %v2373 = vpack.c.b16 %v2149, %v2141
  %v2374 = vpack.c.b16 %v2150, %v2142
  %v2375 = vpack.c.b16 %v2151, %v2143
  %v2376 = vpack.c.b16 %v2160, %v2152
  %v2377 = vpack.c.b16 %v2161, %v2153
  %v2378 = vpack.c.b16 %v2162, %v2154
  %v2379 = vpack.c.b16 %v2163, %v2155
  %v2380 = vpack.c.b16 %v2164, %v2156
  %v2381 = vpack.c.b16 %v2165, %v2157
  %v2382 = vpack.c.b16 %v2166, %v2158
  %v2383 = vpack.c.b16 %v2167, %v2159
  %v2384 = vpack.c.b16 %v2176, %v2168
  %v2385 = vpack.c.b16 %v2177, %v2169
  %v2386 = vpack.c.b16 %v2178, %v2170
  %v2387 = vpack.c.b16 %v2179, %v2171
  %v2388 = vpack.c.b16 %v2180, %v2172
  %v2389 = vpack.c.b16 %v2181, %v2173
  %v2390 = vpack.c.b16 %v2182, %v2174
  %v2391 = vpack.c.b16 %v2183, %v2175
  %v2392 = vpack.c.b16 %v2192, %v2184
  %v2393 = vpack.c.b16 %v2193, %v2185
  %v2394 = vpack.c.b16 %v2194, %v2186
  %v2395 = vpack.c.b16 %v2195, %v2187
  %v2396 = vpack.c.b16 %v2196, %v2188
  %v2397 = vpack.c.b16 %v2197, %v2189
  %v2398 = vpack.c.b16 %v2198, %v2190
  %v2399 = vpack.c.b16 %v2199, %v2191
  %v2400 = vpack.c.b16 %v2208, %v2200
  %v2401 = vpack.c.b16 %v2209, %v2201
  %v2402 = vpack.c.b16 %v2210, %v2202
  %v2403 = vpack.c.b16 %v2211, %v2203
  %v2404 = vpack.c.b16 %v2212, %v2204
  %v2405 = vpack.c.b16 %v2213, %v2205
  %v2406 = vpack.c.b16 %v2214, %v2206
  %v2407 = vpack.c.b16 %v2215, %v2207
  %v2408 = vpack.c.b16 %v2224, %v2216
  %v2409 = vpack.c.b16 %v2225, %v2217
  %v2410 = vpack.c.b16 %v2226, %v2218
  %v2411 = vpack.c.b16 %v2227, %v2219
  %v2412 = vpack.c.b16 %v2228, %v2220
  %v2413 = vpack.c.b16 %v2229, %v2221
  %v2414 = vpack.c.b16 %v2230, %v2222
  %v2415 = vpack.c.b16 %v2231, %v2223
  %v2416 = vpack.c.b16 %v2240, %v2232
  %v2417 = vpack.c.b16 %v2241, %v2233
  %v2418 = vpack.c.b16 %v2242, %v2234
  %v2419 = vpack.c.b16 %v2243, %v2235
  %v2420 = vpack.c.b16 %v2244, %v2236
  %v2421 = vpack.c.b16 %v2245, %v2237
  %v2422 = vpack.c.b16 %v2246, %v2238
  %v2423 = vpack.c.b16 %v2247, %v2239
  %v2424 = vpack.c.b16 %v2256, %v2248
  %v2425 = vpack.c.b16 %v2257, %v2249
  %v2426 = vpack.c.b16 %v2258, %v2250
  %v2427 = vpack.c.b16 %v2259, %v2251
  %v2428 = vpack.c.b16 %v2260, %v2252
  %v2429 = vpack.c.b16 %v2261, %v2253
  %v2430 = vpack.c.b16 %v2262, %v2254
  %v2431 = vpack.c.b16 %v2263, %v2255
  %v2432 = vpack.c.b16 %v2272, %v2264
  %v2433 = vpack.c.b16 %v2273, %v2265
  %v2434 = vpack.c.b16 %v2274, %v2266
  %v2435 = vpack.c.b16 %v2275, %v2267
  %v2436 = vpack.c.b16 %v2276, %v2268
  %v2437 = vpack.c.b16 %v2277, %v2269
  %v2438 = vpack.c.b16 %v2278, %v2270
  %v2439 = vpack.c.b16 %v2279, %v2271
  %v2440 = vpack.c.b16 %v2288, %v2280
  %v2441 = vpack.c.b16 %v2289, %v2281
  %v2442 = vpack.c.b16 %v2290, %v2282
  %v2443 = vpack.c.b16 %v2291, %v2283
  %v2444 = vpack.c.b16 %v2292, %v2284
  %v2445 = vpack.c.b16 %v2293, %v2285
  %v2446 = vpack.c.b16 %v2294, %v2286
  %v2447 = vpack.c.b16 %v2295, %v2287
  %v2448 = vpack.c.b16 %v2304, %v2296
  %v2449 = vpack.c.b16 %v2305, %v2297
  %v2450 = vpack.c.b16 %v2306, %v2298
  %v2451 = vpack.c.b16 %v2307, %v2299
  %v2452 = vpack.c.b16 %v2308, %v2300
  %v2453 = vpack.c.b16 %v2309, %v2301
  %v2454 = vpack.c.b16 %v2310, %v2302
  %v2455 = vpack.c.b16 %v2311, %v2303
  %v2456 = vpack.c.b16 %v2320, %v2312
  %v2457 = vpack.c.b16 %v2321, %v2313
  %v2458 = vpack.c.b16 %v2322, %v2314
  %v2459 = vpack.c.b16 %v2323, %v2315
  %v2460 = vpack.c.b16 %v2324, %v2316
  %v2461 = vpack.c.b16 %v2325, %v2317
  %v2462 = vpack.c.b16 %v2326, %v2318
  %v2463 = vpack.c.b16 %v2327, %v2319
  %v2464 = vpack.c.b16 %v2336, %v2328
  %v2465 = vpack.c.b16 %v2337, %v2329
  %v2466 = vpack.c.b16 %v2338, %v2330
  %v2467 = vpack.c.b16 %v2339, %v2331
  %v2468 = vpack.c.b16 %v2340, %v2332
  %v2469 = vpack.c.b16 %v2341, %v2333
  %v2470 = vpack.c.b16 %v2342, %v2334
  %v2471 = vpack.c.b16 %v2343, %v2335
  %2600 = vmatprep.subr.bf16.mxu0 %v2345
  %2601 = vmatpush1.bf16.msra.mxu0 %v2344
  %2602 = vmatprep.subr.bf16.mxu0 %v2353
  %2603 = vmatpush1.bf16.msra.mxu0 %v2352
  %2604 = vmatprep.subr.bf16.mxu0 %v2361
  %2605 = vmatpush1.bf16.msra.mxu0 %v2360
  %2606 = vmatprep.subr.bf16.mxu0 %v2369
  %2607 = vmatpush1.bf16.msra.mxu0 %v2368
  %2608 = vmatprep.subr.bf16.mxu0 %v2377
  %2609 = vmatpush1.bf16.msra.mxu0 %v2376
  %2610 = vmatprep.subr.bf16.mxu0 %v2385
  %2611 = vmatpush1.bf16.msra.mxu0 %v2384
  %2612 = vmatprep.subr.bf16.mxu0 %v2393
  %2613 = vmatpush1.bf16.msra.mxu0 %v2392
  %2614 = vmatprep.subr.bf16.mxu0 %v2401
  %2615 = vmatpush1.bf16.msra.mxu0 %v2400
  %2616 = vmatprep.subr.bf16.mxu0 %v2409
  %2617 = vmatpush1.bf16.msra.mxu0 %v2408
  %2618 = vmatprep.subr.bf16.mxu0 %v2417
  %2619 = vmatpush1.bf16.msra.mxu0 %v2416
  %2620 = vmatprep.subr.bf16.mxu0 %v2425
  %2621 = vmatpush1.bf16.msra.mxu0 %v2424
  %2622 = vmatprep.subr.bf16.mxu0 %v2433
  %2623 = vmatpush1.bf16.msra.mxu0 %v2432
  %2624 = vmatprep.subr.bf16.mxu0 %v2441
  %2625 = vmatpush1.bf16.msra.mxu0 %v2440
  %2626 = vmatprep.subr.bf16.mxu0 %v2449
  %2627 = vmatpush1.bf16.msra.mxu0 %v2448
  %2628 = vmatprep.subr.bf16.mxu0 %v2457
  %2629 = vmatpush1.bf16.msra.mxu0 %v2456
  %2630 = vmatprep.subr.bf16.mxu0 %v2465
  %2631 = vmatpush1.bf16.msra.mxu0 %v2464
  %2632 = vmatprep.mubr.bf16.mxu0 %v1789
  %2633 = vmatmul.mubr.bf16.gmra.mrb[0].mxu0 %v1788
  %v2634 = vpop.f32.mrb[0].mxu0
  %v2635 = vadd.f32 %v1923, %v2634
  %v2636 = vpop.f32.mrb[0].mxu0
  %v2637 = vadd.f32 %v1927, %v2636
  %v2638 = vpop.f32.mrb[0].mxu0
  %v2639 = vadd.f32 %v1923, %v2638
  %v2640 = vpop.f32.mrb[0].mxu0
  %v2641 = vadd.f32 %v1927, %v2640
  %2642 = vdwg.mxu0
  %2643 = vmatprep.subr.bf16.mxu0 %v2347
  %2644 = vmatpush1.bf16.msra.mxu0 %v2346
  %2645 = vmatprep.subr.bf16.mxu0 %v2355
  %2646 = vmatpush1.bf16.msra.mxu0 %v2354
  %2647 = vmatprep.subr.bf16.mxu0 %v2363
  %2648 = vmatpush1.bf16.msra.mxu0 %v2362
  %2649 = vmatprep.subr.bf16.mxu0 %v2371
  %2650 = vmatpush1.bf16.msra.mxu0 %v2370
  %2651 = vmatprep.subr.bf16.mxu0 %v2379
  %2652 = vmatpush1.bf16.msra.mxu0 %v2378
  %2653 = vmatprep.subr.bf16.mxu0 %v2387
  %2654 = vmatpush1.bf16.msra.mxu0 %v2386
  %2655 = vmatprep.subr.bf16.mxu0 %v2395
  %2656 = vmatpush1.bf16.msra.mxu0 %v2394
  %2657 = vmatprep.subr.bf16.mxu0 %v2403
  %2658 = vmatpush1.bf16.msra.mxu0 %v2402
  %2659 = vmatprep.subr.bf16.mxu0 %v2411
  %2660 = vmatpush1.bf16.msra.mxu0 %v2410
  %2661 = vmatprep.subr.bf16.mxu0 %v2419
  %2662 = vmatpush1.bf16.msra.mxu0 %v2418
  %2663 = vmatprep.subr.bf16.mxu0 %v2427
  %2664 = vmatpush1.bf16.msra.mxu0 %v2426
  %2665 = vmatprep.subr.bf16.mxu0 %v2435
  %2666 = vmatpush1.bf16.msra.mxu0 %v2434
  %2667 = vmatprep.subr.bf16.mxu0 %v2443
  %2668 = vmatpush1.bf16.msra.mxu0 %v2442
  %2669 = vmatprep.subr.bf16.mxu0 %v2451
  %2670 = vmatpush1.bf16.msra.mxu0 %v2450
  %2671 = vmatprep.subr.bf16.mxu0 %v2459
  %2672 = vmatpush1.bf16.msra.mxu0 %v2458
  %2673 = vmatprep.subr.bf16.mxu0 %v2467
  %2674 = vmatpush1.bf16.msra.mxu0 %v2466
  %2675 = vmatprep.mubr.bf16.mxu0 %v1789
  %2676 = vmatmul.mubr.bf16.gmra.mrb[0].mxu0 %v1788
  %v2677 = vpop.f32.mrb[0].mxu0
  %v2678 = vadd.f32 %v1931, %v2677
  %v2679 = vpop.f32.mrb[0].mxu0
  %v2680 = vadd.f32 %v1935, %v2679
  %v2681 = vpop.f32.mrb[0].mxu0
  %v2682 = vadd.f32 %v1931, %v2681
  %v2683 = vpop.f32.mrb[0].mxu0
  %v2684 = vadd.f32 %v1935, %v2683
  %2685 = vdwg.mxu0
  %2686 = vmatprep.subr.bf16.mxu0 %v2349
  %2687 = vmatpush1.bf16.msra.mxu0 %v2348
  %2688 = vmatprep.subr.bf16.mxu0 %v2357
  %2689 = vmatpush1.bf16.msra.mxu0 %v2356
  %2690 = vmatprep.subr.bf16.mxu0 %v2365
  %2691 = vmatpush1.bf16.msra.mxu0 %v2364
  %2692 = vmatprep.subr.bf16.mxu0 %v2373
  %2693 = vmatpush1.bf16.msra.mxu0 %v2372
  %2694 = vmatprep.subr.bf16.mxu0 %v2381
  %2695 = vmatpush1.bf16.msra.mxu0 %v2380
  %2696 = vmatprep.subr.bf16.mxu0 %v2389
  %2697 = vmatpush1.bf16.msra.mxu0 %v2388
  %2698 = vmatprep.subr.bf16.mxu0 %v2397
  %2699 = vmatpush1.bf16.msra.mxu0 %v2396
  %2700 = vmatprep.subr.bf16.mxu0 %v2405
  %2701 = vmatpush1.bf16.msra.mxu0 %v2404
  %2702 = vmatprep.subr.bf16.mxu0 %v2413
  %2703 = vmatpush1.bf16.msra.mxu0 %v2412
  %2704 = vmatprep.subr.bf16.mxu0 %v2421
  %2705 = vmatpush1.bf16.msra.mxu0 %v2420
  %2706 = vmatprep.subr.bf16.mxu0 %v2429
  %2707 = vmatpush1.bf16.msra.mxu0 %v2428
  %2708 = vmatprep.subr.bf16.mxu0 %v2437
  %2709 = vmatpush1.bf16.msra.mxu0 %v2436
  %2710 = vmatprep.subr.bf16.mxu0 %v2445
  %2711 = vmatpush1.bf16.msra.mxu0 %v2444
  %2712 = vmatprep.subr.bf16.mxu0 %v2453
  %2713 = vmatpush1.bf16.msra.mxu0 %v2452
  %2714 = vmatprep.subr.bf16.mxu0 %v2461
  %2715 = vmatpush1.bf16.msra.mxu0 %v2460
  %2716 = vmatprep.subr.bf16.mxu0 %v2469
  %2717 = vmatpush1.bf16.msra.mxu0 %v2468
  %2718 = vmatprep.mubr.bf16.mxu0 %v1789
  %2719 = vmatmul.mubr.bf16.gmra.mrb[0].mxu0 %v1788
  %v2720 = vpop.f32.mrb[0].mxu0
  %v2721 = vadd.f32 %v1939, %v2720
  %v2722 = vpop.f32.mrb[0].mxu0
  %v2723 = vadd.f32 %v1943, %v2722
  %v2724 = vpop.f32.mrb[0].mxu0
  %v2725 = vadd.f32 %v1939, %v2724
  %v2726 = vpop.f32.mrb[0].mxu0
  %v2727 = vadd.f32 %v1943, %v2726
  %2728 = vdwg.mxu0
  %2729 = vmatprep.subr.bf16.mxu0 %v2351
  %2730 = vmatpush1.bf16.msra.mxu0 %v2350
  %2731 = vmatprep.subr.bf16.mxu0 %v2359
  %2732 = vmatpush1.bf16.msra.mxu0 %v2358
  %2733 = vmatprep.subr.bf16.mxu0 %v2367
  %2734 = vmatpush1.bf16.msra.mxu0 %v2366
  %2735 = vmatprep.subr.bf16.mxu0 %v2375
  %2736 = vmatpush1.bf16.msra.mxu0 %v2374
  %2737 = vmatprep.subr.bf16.mxu0 %v2383
  %2738 = vmatpush1.bf16.msra.mxu0 %v2382
  %2739 = vmatprep.subr.bf16.mxu0 %v2391
  %2740 = vmatpush1.bf16.msra.mxu0 %v2390
  %2741 = vmatprep.subr.bf16.mxu0 %v2399
  %2742 = vmatpush1.bf16.msra.mxu0 %v2398
  %2743 = vmatprep.subr.bf16.mxu0 %v2407
  %2744 = vmatpush1.bf16.msra.mxu0 %v2406
  %2745 = vmatprep.subr.bf16.mxu0 %v2415
  %2746 = vmatpush1.bf16.msra.mxu0 %v2414
  %2747 = vmatprep.subr.bf16.mxu0 %v2423
  %2748 = vmatpush1.bf16.msra.mxu0 %v2422
  %2749 = vmatprep.subr.bf16.mxu0 %v2431
  %2750 = vmatpush1.bf16.msra.mxu0 %v2430
  %2751 = vmatprep.subr.bf16.mxu0 %v2439
  %2752 = vmatpush1.bf16.msra.mxu0 %v2438
  %2753 = vmatprep.subr.bf16.mxu0 %v2447
  %2754 = vmatpush1.bf16.msra.mxu0 %v2446
  %2755 = vmatprep.subr.bf16.mxu0 %v2455
  %2756 = vmatpush1.bf16.msra.mxu0 %v2454
  %2757 = vmatprep.subr.bf16.mxu0 %v2463
  %2758 = vmatpush1.bf16.msra.mxu0 %v2462
  %2759 = vmatprep.subr.bf16.mxu0 %v2471
  %2760 = vmatpush1.bf16.msra.mxu0 %v2470
  %2761 = vmatprep.mubr.bf16.mxu0 %v1789
  %2762 = vmatmul.mubr.bf16.gmra.mrb[0].mxu0 %v1788
  %v2763 = vpop.f32.mrb[0].mxu0
  %v2764 = vadd.f32 %v1947, %v2763
  %v2765 = vpop.f32.mrb[0].mxu0
  %v2766 = vadd.f32 %v1951, %v2765
  %v2767 = vpop.f32.mrb[0].mxu0
  %v2768 = vadd.f32 %v1947, %v2767
  %v2769 = vpop.f32.mrb[0].mxu0
  %v2770 = vadd.f32 %v1951, %v2769
  %2771 = vdwg.mxu0
  %v2772 = vmul.f32 %v2635, 0.2
  %v2773 = vmul.f32 %v2637, 0.2
  %v2774 = vmul.f32 %v2678, 0.2
  %v2775 = vmul.f32 %v2680, 0.2
  %v2776 = vmul.f32 %v2721, 0.2
  %v2777 = vmul.f32 %v2723, 0.2
  %v2778 = vmul.f32 %v2764, 0.2
  %v2779 = vmul.f32 %v2766, 0.2
  %v2780 = vmul.f32 %v2639, 0.2
  %v2781 = vmul.f32 %v2641, 0.2
  %v2782 = vmul.f32 %v2682, 0.2
  %v2783 = vmul.f32 %v2684, 0.2
  %v2784 = vmul.f32 %v2725, 0.2
  %v2785 = vmul.f32 %v2727, 0.2
  %v2786 = vmul.f32 %v2768, 0.2
  %v2787 = vmul.f32 %v2770, 0.2
  %v2788 = vmax.f32 %v2635, %v2772
  %v2789 = vmax.f32 %v2637, %v2773
  %v2790 = vmax.f32 %v2678, %v2774
  %v2791 = vmax.f32 %v2680, %v2775
  %v2792 = vmax.f32 %v2721, %v2776
  %v2793 = vmax.f32 %v2723, %v2777
  %v2794 = vmax.f32 %v2764, %v2778
  %v2795 = vmax.f32 %v2766, %v2779
  %v2796 = vmax.f32 %v2639, %v2780
  %v2797 = vmax.f32 %v2641, %v2781
  %v2798 = vmax.f32 %v2682, %v2782
  %v2799 = vmax.f32 %v2684, %v2783
  %v2800 = vmax.f32 %v2725, %v2784
  %v2801 = vmax.f32 %v2727, %v2785
  %v2802 = vmax.f32 %v2768, %v2786
  %v2803 = vmax.f32 %v2770, %v2787
  %2804 = vst [vmem:[%s7] sm:$0xff] %v2788
  %2805 = vst [vmem:[%s7 + $0x8] sm:$0xff] %v2789
  %2806 = vst [vmem:[%s7 + $0x10] sm:$0xff] %v2790
  %2807 = vst [vmem:[%s7 + $0x18] sm:$0xff] %v2791
  %2808 = vst [vmem:[%s7 + $0x20] sm:$0xff] %v2792
  %2809 = vst [vmem:[%s7 + $0x28] sm:$0xff] %v2793
  %2810 = vst [vmem:[%s7 + $0x30] sm:$0xff] %v2794
  %2811 = vst [vmem:[%s7 + $0x38] sm:$0xff] %v2795
  %2812 = vst [vmem:[%s7 + $0x40] sm:$0xff] %v2796
  %2813 = vst [vmem:[%s7 + $0x48] sm:$0xff] %v2797
  %2814 = vst [vmem:[%s7 + $0x50] sm:$0xff] %v2798
  %2815 = vst [vmem:[%s7 + $0x58] sm:$0xff] %v2799
  %2816 = vst [vmem:[%s7 + $0x60] sm:$0xff] %v2800
  %2817 = vst [vmem:[%s7 + $0x68] sm:$0xff] %v2801
  %2818 = vst [vmem:[%s7 + $0x70] sm:$0xff] %v2802
  %2819 = vst [vmem:[%s7 + $0x78] sm:$0xff] %v2803
  // Predicated region
  $region30: #{forward.1} parent=0 // pred_check
    _
  $region31: #{forward.1} parent=0 // pred_check_branch
    %2821 = sbr.rel (0) target = $region33
  $region32: #{forward.1} parent=0 // pred_region
    _
  $region33: #{forward.1} parent=0 // pred_fallthru
    _
  // Predicated region
  $region34: #{forward.1} parent=0 // pred_check
    _
  $region35: #{forward.1} parent=0 // pred_check_branch
    %2823 = sbr.rel (0) target = $region37
  $region36: #{forward.1} parent=0 // pred_region
    _
  $region37: #{forward.1} parent=0 // pred_fallthru
    _

</llo_original>
